<compile_context>
chip_gen: v6e
topology: v6e:2x2x1
jax: 0.10.0
libtpu: 0.0.40
codegen_flags: <defaults>
</compile_context>

<pallas_src>
import functools

import jax
import jax.numpy as jnp
from jax import lax
from jax.experimental import pallas as pl
from jax.experimental.pallas import tpu as pltpu

EPS = 1e-12


def _round_up(x, m):
    return ((x + m - 1) // m) * m


def _encoder_kernel(chunks_ref, a_ref, params_ref, out_ref, cs_ref, cp_ref, *,
                    blk_t, hop, r, n_ch, eps):
    """One (batch b, time-block tb) tile of fused STFT+conv -> cLN -> PReLU.

    chunks: (blk_t + r - 1, hop)  hop-sized waveform chunks; frame t = chunks[t : t+r]
    a:      (n_fft, C)            fused  diag(hann) @ DFT_interleaved @ W_conv^T
    params: (C, 4)                columns: conv bias, cLN gamma, cLN beta, PReLU alpha
    out:    (C, blk_t)            channel-major output tile (transpose fused in-kernel)
    cs/cp:  (1, 1) VMEM carries   running cLN sum / sum-of-squares across time blocks
    """
    tb = pl.program_id(1)

    # Reset the cLN carry at the first time block of each batch element.
    @pl.when(tb == 0)
    def _():
        cs_ref[...] = jnp.zeros_like(cs_ref)
        cp_ref[...] = jnp.zeros_like(cp_ref)

    # Rebuild the (blk_t, n_fft) frame tile from r overlapping hop-chunk slices
    # (cheap VMEM lane-concat) and run ONE full-K MXU matmul against the fused A.
    frames = jnp.concatenate(
        [chunks_ref[s:s + blk_t, :] for s in range(r)], axis=1)        # (blk_t, n_fft)
    y = jnp.dot(frames, a_ref[...], preferred_element_type=jnp.float32)  # (blk_t, C)

    # Transpose once (XLU) and do the whole epilogue channel-major so the HBM store
    # is lane-dense along time and no separate output-transpose pass is needed.
    yt = y.T + params_ref[:, 0:1]                                       # (C, blk_t) + bias

    # ---- cLN: cumulative layer norm over (channels, time <= t) ----
    s_row = jnp.sum(yt, axis=0, keepdims=True)                          # (1, blk_t)
    p_row = jnp.sum(yt * yt, axis=0, keepdims=True)                     # (1, blk_t)
    rp = jnp.concatenate([s_row, p_row], axis=0)                        # (2, blk_t)

    # In-block inclusive prefix sum along time (lanes): log2(blk_t) shift+add steps
    # on a tiny (2, blk_t) tile -- no tri matrix, no big iota, no extra MXU pass.
    shift = 1
    while shift < blk_t:
        rp = rp + jnp.concatenate(
            [jnp.zeros((2, shift), jnp.float32), rp[:, :blk_t - shift]], axis=1)
        shift *= 2

    cum_s = rp[0:1, :] + cs_ref[...]                                    # (1, blk_t)
    cum_p = rp[1:2, :] + cp_ref[...]
    # Carry running totals into the next time block of this batch element.  Padded
    # tail frames (zeros -> y == bias) only appear AFTER all valid frames of a batch
    # element and the carry resets at tb == 0, so valid outputs are unaffected.
    cs_ref[...] = cum_s[:, blk_t - 1:blk_t]
    cp_ref[...] = cum_p[:, blk_t - 1:blk_t]

    # Element count up to (and including) global frame t:  C * (t + 1)
    t_idx = lax.broadcasted_iota(jnp.int32, (1, blk_t), 1).astype(jnp.float32)
    count = n_ch * ((tb * blk_t).astype(jnp.float32) + t_idx + 1.0)

    mean = cum_s / count
    # Clamp: cum_p/count - mean^2 can go slightly negative from f32 cancellation.
    var = jnp.maximum(cum_p / count - mean * mean, 0.0)
    rstd = lax.rsqrt(var + eps)                                         # EUP

    z = (yt - mean) * rstd * params_ref[:, 1:2] + params_ref[:, 2:3]
    out_ref[...] = jnp.where(z > 0.0, z, params_ref[:, 3:4] * z)        # PReLU


class NakedEncoderPallas:
    """JAX/Pallas port of Naked_Encoder(feat_type='fft', causal=True)."""

    def __init__(self, win_len=128, win_inc=32, fft_len=128, eps=EPS,
                 block_t=1024, key=jax.random.PRNGKey(42)):
        assert win_len == fft_len, "this port assumes win_length == n_fft (as used here)"
        assert fft_len % win_inc == 0 and fft_len % 8 == 0
        self.win_len = win_len
        self.win_inc = win_inc
        self.fft_len = fft_len
        self.eps = float(eps)
        self.block_t = max(128, (int(block_t) // 128) * 128)   # time-block (frames), x128

        c_in = fft_len + 2           # 2 * (fft_len//2 + 1) interleaved Re/Im channels
        c_out = fft_len
        nfreq = fft_len // 2 + 1

        k_w, k_b, k_a, k_g, k_be = jax.random.split(key, 5)
        # Conv1d(fft_len+2 -> fft_len, kernel_size=1): weight (C_out, C_in), bias (C_out,)
        self._w_conv = 0.05 * jax.random.normal(k_w, (c_out, c_in), jnp.float32)
        self._bias_vec = 0.05 * jax.random.normal(k_b, (c_out,), jnp.float32)
        # PReLU(fft_len): torch init 0.25 (+ small perturbation); cLN gamma/beta.
        self._alpha_vec = 0.25 + 0.05 * jax.random.uniform(k_a, (c_out,), jnp.float32)
        self._gamma_vec = 1.0 + 0.05 * jax.random.normal(k_g, (c_out,), jnp.float32)
        self._beta_vec = 0.05 * jax.random.normal(k_be, (c_out,), jnp.float32)
        # Packed resident params: columns [conv bias, gamma, beta, prelu alpha].
        self.params = jnp.stack([self._bias_vec, self._gamma_vec,
                                 self._beta_vec, self._alpha_vec], axis=1)   # (C, 4)

        # torch.hann_window(win_len) (periodic=True)
        n = jnp.arange(fft_len, dtype=jnp.float32)
        self.window = 0.5 - 0.5 * jnp.cos(2.0 * jnp.pi * n / win_len)

        # Forward one-sided DFT basis with torch's Re/Im channel interleaving and the
        # analysis window folded in:  spec[t, 2f]   =  sum_n x_n w_n cos(2*pi*f*n/N)
        #                             spec[t, 2f+1] = -sum_n x_n w_n sin(2*pi*f*n/N)
        k = jnp.arange(nfreq, dtype=jnp.float32)
        ang = 2.0 * jnp.pi * n[:, None] * k[None, :] / fft_len        # (N, F)
        cosb = self.window[:, None] * jnp.cos(ang)
        sinb = -self.window[:, None] * jnp.sin(ang)
        basis = jnp.zeros((fft_len, 2 * nfreq), jnp.float32)
        basis = basis.at[:, 0::2].set(cosb).at[:, 1::2].set(sinb)     # (N, C_in)

        # Fuse STFT basis + 1x1 conv into a single (N, C_out) matrix (drops the padded
        # 130-lane intermediate; the Im(DC)/Im(Nyquist) columns of `basis` are zero).
        self.A = basis @ self._w_conv.T                               # (fft_len, fft_len)

        self._forward = jax.jit(self._forward_impl)

    def _forward_impl(self, inputs):
        x = jnp.asarray(inputs, jnp.float32)
        if x.ndim == 1:
            x = x[None, :]
        elif x.ndim == 3:
            x = x.reshape(-1, x.shape[-1])
        B, L = x.shape
        n_fft, hop = self.fft_len, self.win_inc
        c_out = n_fft
        r = n_fft // hop
        T = 1 + L // hop

        blk_t = min(self.block_t, _round_up(T, 128))
        ntb = -(-T // blk_t)
        t_pad = ntb * blk_t

        # torch.stft framing (center=True, reflect pad by n_fft//2, hop=win_inc) as
        # hop-chunks.  Padding for the whole-block roundup is zeros strictly at the
        # END of each batch element (the resulting pad frames only touch the cLN
        # carry after every valid frame, and the carry resets at tb == 0).
        pad = n_fft // 2
        xp = jnp.pad(x, ((0, 0), (pad, pad)), mode="reflect")
        n_chunks = t_pad + blk_t                       # headroom for the halo slice
        xp = jnp.pad(xp, ((0, 0), (0, n_chunks * hop - xp.shape[1])))
        chunks = xp.reshape(B, n_chunks, hop)
        main = chunks[:, :t_pad].reshape(B, ntb, blk_t, hop)
        halo = chunks[:, blk_t:blk_t + t_pad].reshape(B, ntb, blk_t, hop)[:, :, :r - 1]
        chunks_blk = jnp.concatenate([main, halo], axis=2)   # (B, ntb, blk_t+r-1, hop)

        kernel = functools.partial(_encoder_kernel, blk_t=blk_t, hop=hop, r=r,
                                   n_ch=float(c_out), eps=self.eps)
        cost = pl.CostEstimate(
            flops=2 * B * t_pad * n_fft * c_out,
            transcendentals=B * t_pad,
            bytes_accessed=4 * (int(chunks_blk.size) + B * c_out * t_pad
                                + n_fft * c_out + c_out * 4),
        )

        out = pl.pallas_call(
            kernel,
            out_shape=jax.ShapeDtypeStruct((B, c_out, t_pad), jnp.float32),
            grid_spec=pltpu.PrefetchScalarGridSpec(
                num_scalar_prefetch=0,
                grid=(B, ntb),                         # batch parallel, time sequential
                in_specs=[
                    # halo'd hop-chunk tile (last two dims == full array dims)
                    pl.BlockSpec((None, None, blk_t + r - 1, hop),
                                 lambda b, t: (b, t, 0, 0)),
                    pl.BlockSpec((n_fft, c_out), lambda b, t: (0, 0)),   # fused A, resident
                    pl.BlockSpec((c_out, 4), lambda b, t: (0, 0)),       # packed params
                ],
                out_specs=pl.BlockSpec((None, c_out, blk_t), lambda b, t: (b, 0, t)),
                scratch_shapes=[pltpu.VMEM((1, 1), jnp.float32),         # cLN running sum
                                pltpu.VMEM((1, 1), jnp.float32)],        # cLN running sum-sq
            ),
            compiler_params=pltpu.CompilerParams(
                dimension_semantics=("parallel", "arbitrary")),
            cost_estimate=cost,
        )(chunks_blk, self.A, self.params)

        if t_pad != T:                                  # drop padded tail frames
            out = out[:, :, :T]
        return out                                      # (B, fft_len, T) -- NCW like torch

    def __call__(self, inputs):
        return self._forward(inputs)


def _reference_forward(enc, x):
    """Pure-JAX reference: stft (via rfft) -> 1x1 conv -> cLN -> PReLU."""
    x = jnp.asarray(x, jnp.float32)
    if x.ndim == 1:
        x = x[None, :]
    elif x.ndim == 3:
        x = x.reshape(-1, x.shape[-1])
    B, L = x.shape
    hop, n_fft = enc.win_inc, enc.fft_len
    T = 1 + L // hop
    pad = n_fft // 2
    xp = jnp.pad(x, ((0, 0), (pad, pad)), mode="reflect")
    idx = jnp.arange(T)[:, None] * hop + jnp.arange(n_fft)[None, :]
    frames = xp[:, idx]                                               # (B, T, n_fft)
    spec = jnp.fft.rfft(frames * enc.window[None, None, :], n=n_fft, axis=-1)
    nfreq = n_fft // 2 + 1
    ch = jnp.stack([jnp.real(spec), jnp.imag(spec)], axis=-1).reshape(B, T, 2 * nfreq)
    y = ch @ enc._w_conv.T + enc._bias_vec[None, None, :]             # (B, T, C)
    C = n_fft
    s = jnp.cumsum(jnp.sum(y, axis=-1), axis=-1)                      # (B, T)
    p = jnp.cumsum(jnp.sum(y * y, axis=-1), axis=-1)
    cnt = C * jnp.arange(1, T + 1, dtype=jnp.float32)
    mean = s / cnt
    var = p / cnt - mean ** 2
    z = (y - mean[..., None]) / jnp.sqrt(var[..., None] + enc.eps)
    z = z * enc._gamma_vec[None, None, :] + enc._beta_vec[None, None, :]
    out = jnp.where(z > 0, z, enc._alpha_vec[None, None, :] * z)
    return jnp.transpose(out, (0, 2, 1))


if __name__ == "__main__":
    WIN_LEN = FFT_LEN = 128
    WIN_INC = 32

    # Case 1: T = 128 frames -> exactly one 128-frame time block, no output padding.
    B, L = 2, 32 * 127                   # T = 1 + L // 32 = 128
    enc = NakedEncoderPallas(win_len=WIN_LEN, win_inc=WIN_INC, fft_len=FFT_LEN,
                             key=jax.random.PRNGKey(42))
    x = jax.random.normal(jax.random.PRNGKey(0), (B, L), dtype=jnp.float32)
    out = enc(x)
    jax.block_until_ready(out)
    T = 1 + L // WIN_INC
    assert out.shape == (B, FFT_LEN, T), out.shape
    assert bool(jnp.all(jnp.isfinite(out)))
    ref = _reference_forward(enc, x)
    err = float(jnp.max(jnp.abs(out - ref)))
    assert err < 5e-3, f"case1 max abs err vs reference = {err}"

    # Case 2: multi-block time axis (cLN carry across blocks) + padded ragged tail.
    enc2 = NakedEncoderPallas(win_len=WIN_LEN, win_inc=WIN_INC, fft_len=FFT_LEN,
                              block_t=128, key=jax.random.PRNGKey(42))
    B2, L2 = 2, 32 * 191                 # T = 192 -> two 128-frame blocks, 64 pad frames
    x2 = jax.random.normal(jax.random.PRNGKey(1), (B2, L2), dtype=jnp.float32)
    out2 = enc2(x2)
    jax.block_until_ready(out2)
    T2 = 1 + L2 // WIN_INC
    assert out2.shape == (B2, FFT_LEN, T2), out2.shape
    assert bool(jnp.all(jnp.isfinite(out2)))
    ref2 = _reference_forward(enc2, x2)
    err2 = float(jnp.max(jnp.abs(out2 - ref2)))
    assert err2 < 5e-3, f"case2 max abs err vs reference = {err2}"

    print("KERNEL_OK")
</pallas_src>

<mosaic_0001>
module attributes {stable_mosaic.version = 11 : i64} {
  func.func @_encoder_kernel(%arg0: i32, %arg1: i32, %arg2: memref<1x1x131x32xf32, #tpu.memory_space<vmem>>, %arg3: memref<128x128xf32, #tpu.memory_space<vmem>>, %arg4: memref<128x4xf32, #tpu.memory_space<vmem>>, %arg5: memref<1x128x128xf32, #tpu.memory_space<vmem>>, %arg6: memref<1x1xf32, #tpu.memory_space<vmem>>, %arg7: memref<1x1xf32, #tpu.memory_space<vmem>>) attributes {dimension_semantics = [#tpu.dimension_semantics<parallel>, #tpu.dimension_semantics<arbitrary>], iteration_bounds = array<i64: 2, 1>, scalar_prefetch = 0 : i64, scratch_operands = 2 : i64, tpu.core_type = #tpu.core_type<tc>, window_params = [{transform_indices = @transform_0, window_bounds = array<i64: 1, 1, 131, 32>}, {pipeline_mode = #tpu.pipeline_mode<synchronous>, transform_indices = @transform_1, window_bounds = array<i64: 128, 128>}, {pipeline_mode = #tpu.pipeline_mode<synchronous>, transform_indices = @transform_2, window_bounds = array<i64: 128, 4>}, {transform_indices = @transform_3, window_bounds = array<i64: 1, 128, 128>}]} {
    %c0_i32 = arith.constant 0 : i32
    %0 = arith.cmpi eq, %arg1, %c0_i32 : i32
    %1 = arith.extui %0 : i1 to i32
    %c0_i32_0 = arith.constant 0 : i32
    %2 = arith.cmpi ne, %1, %c0_i32_0 : i32
    scf.if %2 {
      %cst_48 = arith.constant 0.000000e+00 : f32
      %102 = vector.broadcast %cst_48 : f32 to vector<1x1xf32>
      %c0_49 = arith.constant 0 : index
      %c0_50 = arith.constant 0 : index
      %103 = vector.load %arg6[%c0_49, %c0_50] : memref<1x1xf32, #tpu.memory_space<vmem>>, vector<1x1xf32>
      tpu.vector_store %arg6[%c0_49, %c0_50], %102 {strides = array<i32>} : memref<1x1xf32, #tpu.memory_space<vmem>>, vector<1x1xf32>,
      %cst_51 = arith.constant 0.000000e+00 : f32
      %104 = vector.broadcast %cst_51 : f32 to vector<1x1xf32>
      %c0_52 = arith.constant 0 : index
      %c0_53 = arith.constant 0 : index
      %105 = vector.load %arg7[%c0_52, %c0_53] : memref<1x1xf32, #tpu.memory_space<vmem>>, vector<1x1xf32>
      tpu.vector_store %arg7[%c0_52, %c0_53], %104 {strides = array<i32>} : memref<1x1xf32, #tpu.memory_space<vmem>>, vector<1x1xf32>,
    } else {
    }
    %c0 = arith.constant 0 : index
    %c0_1 = arith.constant 0 : index
    %c0_2 = arith.constant 0 : index
    %c0_3 = arith.constant 0 : index
    %3 = vector.load %arg2[%c0, %c0_1, %c0_2, %c0_3] : memref<1x1x131x32xf32, #tpu.memory_space<vmem>>, vector<1x1x128x32xf32>
    %4 = vector.shape_cast %3 : vector<1x1x128x32xf32> to vector<128x32xf32>
    %c0_4 = arith.constant 0 : index
    %c0_5 = arith.constant 0 : index
    %c1 = arith.constant 1 : index
    %c0_6 = arith.constant 0 : index
    %5 = vector.load %arg2[%c0_4, %c0_5, %c1, %c0_6] : memref<1x1x131x32xf32, #tpu.memory_space<vmem>>, vector<1x1x128x32xf32>
    %6 = vector.shape_cast %5 : vector<1x1x128x32xf32> to vector<128x32xf32>
    %c0_7 = arith.constant 0 : index
    %c0_8 = arith.constant 0 : index
    %c2 = arith.constant 2 : index
    %c0_9 = arith.constant 0 : index
    %7 = vector.load %arg2[%c0_7, %c0_8, %c2, %c0_9] : memref<1x1x131x32xf32, #tpu.memory_space<vmem>>, vector<1x1x128x32xf32>
    %8 = vector.shape_cast %7 : vector<1x1x128x32xf32> to vector<128x32xf32>
    %c0_10 = arith.constant 0 : index
    %c0_11 = arith.constant 0 : index
    %c3 = arith.constant 3 : index
    %c0_12 = arith.constant 0 : index
    %9 = vector.load %arg2[%c0_10, %c0_11, %c3, %c0_12] : memref<1x1x131x32xf32, #tpu.memory_space<vmem>>, vector<1x1x128x32xf32>
    %10 = vector.shape_cast %9 : vector<1x1x128x32xf32> to vector<128x32xf32>
    %11 = tpu.concatenate %4, %6, %8, %10 in 1 : vector<128x32xf32>, vector<128x32xf32>, vector<128x32xf32>, vector<128x32xf32> -> vector<128x128xf32>
    %c0_13 = arith.constant 0 : index
    %c0_14 = arith.constant 0 : index
    %12 = vector.load %arg3[%c0_13, %c0_14] : memref<128x128xf32, #tpu.memory_space<vmem>>, vector<128x128xf32>
    %cst = arith.constant dense<0.000000e+00> : vector<128x128xf32>
    %13 = tpu.matmul %11, %12, %cst {dimension_numbers = #tpu.dot_dimension_numbers<[1], [0], [0], [1], [0, 0, 1, 1], [], []>} : vector<128x128xf32>, vector<128x128xf32>, vector<128x128xf32> -> vector<128x128xf32>
    %14 = tpu.transpose %13, [1, 0] : vector<128x128xf32> -> vector<128x128xf32>
    %c0_15 = arith.constant 0 : index
    %c0_16 = arith.constant 0 : index
    %15 = vector.load %arg4[%c0_15, %c0_16] : memref<128x4xf32, #tpu.memory_space<vmem>>, vector<128x1xf32>
    %16 = vector.broadcast %15 : vector<128x1xf32> to vector<128x128xf32>
    %17 = arith.addf %14, %16 : vector<128x128xf32>
    %cst_17 = arith.constant dense<0.000000e+00> : vector<128xf32>
    %18 = vector.multi_reduction <add>, %17, %cst_17 [0] : vector<128x128xf32> to vector<128xf32>
    %19 = vector.shape_cast %18 : vector<128xf32> to vector<1x128xf32>
    %20 = arith.mulf %17, %17 : vector<128x128xf32>
    %cst_18 = arith.constant dense<0.000000e+00> : vector<128xf32>
    %21 = vector.multi_reduction <add>, %20, %cst_18 [0] : vector<128x128xf32> to vector<128xf32>
    %22 = vector.shape_cast %21 : vector<128xf32> to vector<1x128xf32>
    %23 = tpu.concatenate %19, %22 in 0 : vector<1x128xf32>, vector<1x128xf32> -> vector<2x128xf32>
    %cst_19 = arith.constant 0.000000e+00 : f32
    %24 = vector.broadcast %cst_19 : f32 to vector<2x1xf32>
    %25 = vector.extract_strided_slice %23 {offsets = [0, 0], sizes = [2, 127], strides = [1, 1]} : vector<2x128xf32> to vector<2x127xf32>
    %26 = tpu.concatenate %24, %25 in 1 : vector<2x1xf32>, vector<2x127xf32> -> vector<2x128xf32>
    %27 = arith.addf %23, %26 : vector<2x128xf32>
    %cst_20 = arith.constant 0.000000e+00 : f32
    %28 = vector.broadcast %cst_20 : f32 to vector<2x2xf32>
    %29 = vector.extract_strided_slice %27 {offsets = [0, 0], sizes = [2, 126], strides = [1, 1]} : vector<2x128xf32> to vector<2x126xf32>
    %30 = tpu.concatenate %28, %29 in 1 : vector<2x2xf32>, vector<2x126xf32> -> vector<2x128xf32>
    %31 = arith.addf %27, %30 : vector<2x128xf32>
    %cst_21 = arith.constant 0.000000e+00 : f32
    %32 = vector.broadcast %cst_21 : f32 to vector<2x4xf32>
    %33 = vector.extract_strided_slice %31 {offsets = [0, 0], sizes = [2, 124], strides = [1, 1]} : vector<2x128xf32> to vector<2x124xf32>
    %34 = tpu.concatenate %32, %33 in 1 : vector<2x4xf32>, vector<2x124xf32> -> vector<2x128xf32>
    %35 = arith.addf %31, %34 : vector<2x128xf32>
    %cst_22 = arith.constant 0.000000e+00 : f32
    %36 = vector.broadcast %cst_22 : f32 to vector<2x8xf32>
    %37 = vector.extract_strided_slice %35 {offsets = [0, 0], sizes = [2, 120], strides = [1, 1]} : vector<2x128xf32> to vector<2x120xf32>
    %38 = tpu.concatenate %36, %37 in 1 : vector<2x8xf32>, vector<2x120xf32> -> vector<2x128xf32>
    %39 = arith.addf %35, %38 : vector<2x128xf32>
    %cst_23 = arith.constant 0.000000e+00 : f32
    %40 = vector.broadcast %cst_23 : f32 to vector<2x16xf32>
    %41 = vector.extract_strided_slice %39 {offsets = [0, 0], sizes = [2, 112], strides = [1, 1]} : vector<2x128xf32> to vector<2x112xf32>
    %42 = tpu.concatenate %40, %41 in 1 : vector<2x16xf32>, vector<2x112xf32> -> vector<2x128xf32>
    %43 = arith.addf %39, %42 : vector<2x128xf32>
    %cst_24 = arith.constant 0.000000e+00 : f32
    %44 = vector.broadcast %cst_24 : f32 to vector<2x32xf32>
    %45 = vector.extract_strided_slice %43 {offsets = [0, 0], sizes = [2, 96], strides = [1, 1]} : vector<2x128xf32> to vector<2x96xf32>
    %46 = tpu.concatenate %44, %45 in 1 : vector<2x32xf32>, vector<2x96xf32> -> vector<2x128xf32>
    %47 = arith.addf %43, %46 : vector<2x128xf32>
    %cst_25 = arith.constant 0.000000e+00 : f32
    %48 = vector.broadcast %cst_25 : f32 to vector<2x64xf32>
    %49 = vector.extract_strided_slice %47 {offsets = [0, 0], sizes = [2, 64], strides = [1, 1]} : vector<2x128xf32> to vector<2x64xf32>
    %50 = tpu.concatenate %48, %49 in 1 : vector<2x64xf32>, vector<2x64xf32> -> vector<2x128xf32>
    %51 = arith.addf %47, %50 : vector<2x128xf32>
    %52 = vector.extract_strided_slice %51 {offsets = [0, 0], sizes = [1, 128], strides = [1, 1]} : vector<2x128xf32> to vector<1x128xf32>
    %c0_26 = arith.constant 0 : index
    %c0_27 = arith.constant 0 : index
    %53 = vector.load %arg6[%c0_26, %c0_27] : memref<1x1xf32, #tpu.memory_space<vmem>>, vector<1x1xf32>
    %54 = vector.broadcast %53 : vector<1x1xf32> to vector<1x128xf32>
    %55 = arith.addf %52, %54 : vector<1x128xf32>
    %56 = vector.extract_strided_slice %51 {offsets = [1, 0], sizes = [1, 128], strides = [1, 1]} : vector<2x128xf32> to vector<1x128xf32>
    %c0_28 = arith.constant 0 : index
    %c0_29 = arith.constant 0 : index
    %57 = vector.load %arg7[%c0_28, %c0_29] : memref<1x1xf32, #tpu.memory_space<vmem>>, vector<1x1xf32>
    %58 = vector.broadcast %57 : vector<1x1xf32> to vector<1x128xf32>
    %59 = arith.addf %56, %58 : vector<1x128xf32>
    %60 = vector.extract_strided_slice %55 {offsets = [0, 127], sizes = [1, 1], strides = [1, 1]} : vector<1x128xf32> to vector<1x1xf32>
    %c0_30 = arith.constant 0 : index
    %c0_31 = arith.constant 0 : index
    %61 = vector.load %arg6[%c0_30, %c0_31] : memref<1x1xf32, #tpu.memory_space<vmem>>, vector<1x1xf32>
    tpu.vector_store %arg6[%c0_30, %c0_31], %60 {strides = array<i32>} : memref<1x1xf32, #tpu.memory_space<vmem>>, vector<1x1xf32>,
    %62 = vector.extract_strided_slice %59 {offsets = [0, 127], sizes = [1, 1], strides = [1, 1]} : vector<1x128xf32> to vector<1x1xf32>
    %c0_32 = arith.constant 0 : index
    %c0_33 = arith.constant 0 : index
    %63 = vector.load %arg7[%c0_32, %c0_33] : memref<1x1xf32, #tpu.memory_space<vmem>>, vector<1x1xf32>
    tpu.vector_store %arg7[%c0_32, %c0_33], %62 {strides = array<i32>} : memref<1x1xf32, #tpu.memory_space<vmem>>, vector<1x1xf32>,
    %64 = tpu.iota {dimensions = array<i32: 1>} : vector<1x128xi32>
    %65 = arith.sitofp %64 : vector<1x128xi32> to vector<1x128xf32>
    %c128_i32 = arith.constant 128 : i32
    %66 = arith.muli %arg1, %c128_i32 : i32
    %67 = arith.sitofp %66 : i32 to f32
    %68 = vector.broadcast %67 : f32 to vector<1x128xf32>
    %69 = arith.addf %68, %65 : vector<1x128xf32>
    %cst_34 = arith.constant 1.000000e+00 : f32
    %70 = vector.broadcast %cst_34 : f32 to vector<1x128xf32>
    %71 = arith.addf %69, %70 : vector<1x128xf32>
    %cst_35 = arith.constant 1.280000e+02 : f32
    %72 = vector.broadcast %cst_35 : f32 to vector<1x128xf32>
    %73 = arith.mulf %72, %71 : vector<1x128xf32>
    %74 = arith.divf %55, %73 : vector<1x128xf32>
    %75 = arith.divf %59, %73 : vector<1x128xf32>
    %76 = arith.mulf %74, %74 : vector<1x128xf32>
    %77 = arith.subf %75, %76 : vector<1x128xf32>
    %cst_36 = arith.constant 0.000000e+00 : f32
    %78 = vector.broadcast %cst_36 : f32 to vector<1x128xf32>
    %79 = arith.maximumf %77, %78 : vector<1x128xf32>
    %cst_37 = arith.constant 9.99999996E-13 : f32
    %80 = vector.broadcast %cst_37 : f32 to vector<1x128xf32>
    %81 = arith.addf %79, %80 : vector<1x128xf32>
    %82 = math.rsqrt %81 : vector<1x128xf32>
    %83 = vector.broadcast %74 : vector<1x128xf32> to vector<128x128xf32>
    %84 = arith.subf %17, %83 : vector<128x128xf32>
    %85 = vector.broadcast %82 : vector<1x128xf32> to vector<128x128xf32>
    %86 = arith.mulf %84, %85 : vector<128x128xf32>
    %c0_38 = arith.constant 0 : index
    %c1_39 = arith.constant 1 : index
    %87 = vector.load %arg4[%c0_38, %c1_39] : memref<128x4xf32, #tpu.memory_space<vmem>>, vector<128x1xf32>
    %88 = vector.broadcast %87 : vector<128x1xf32> to vector<128x128xf32>
    %89 = arith.mulf %86, %88 : vector<128x128xf32>
    %c0_40 = arith.constant 0 : index
    %c2_41 = arith.constant 2 : index
    %90 = vector.load %arg4[%c0_40, %c2_41] : memref<128x4xf32, #tpu.memory_space<vmem>>, vector<128x1xf32>
    %91 = vector.broadcast %90 : vector<128x1xf32> to vector<128x128xf32>
    %92 = arith.addf %89, %91 : vector<128x128xf32>
    %cst_42 = arith.constant 0.000000e+00 : f32
    %93 = vector.broadcast %cst_42 : f32 to vector<128x128xf32>
    %94 = arith.cmpf ogt, %92, %93 : vector<128x128xf32>
    %c0_43 = arith.constant 0 : index
    %c3_44 = arith.constant 3 : index
    %95 = vector.load %arg4[%c0_43, %c3_44] : memref<128x4xf32, #tpu.memory_space<vmem>>, vector<128x1xf32>
    %96 = vector.broadcast %95 : vector<128x1xf32> to vector<128x128xf32>
    %97 = arith.mulf %96, %92 : vector<128x128xf32>
    %98 = arith.select %94, %92, %97 : vector<128x128xi1>, vector<128x128xf32>
    %c0_45 = arith.constant 0 : index
    %c0_46 = arith.constant 0 : index
    %c0_47 = arith.constant 0 : index
    %99 = vector.load %arg5[%c0_45, %c0_46, %c0_47] : memref<1x128x128xf32, #tpu.memory_space<vmem>>, vector<1x128x128xf32>
    %100 = vector.shape_cast %99 : vector<1x128x128xf32> to vector<128x128xf32>
    %101 = vector.shape_cast %98 : vector<128x128xf32> to vector<1x128x128xf32>
    tpu.vector_store %arg5[%c0_45, %c0_46, %c0_47], %101 {strides = array<i32>} : memref<1x128x128xf32, #tpu.memory_space<vmem>>, vector<1x128x128xf32>,
    return
  }
  func.func @transform_0(%arg0: i32, %arg1: i32) -> (i32, i32, i32, i32) {
    %c0_i32 = arith.constant 0 : i32
    %c0_i32_0 = arith.constant 0 : i32
    %c0_i32_1 = arith.constant 0 : i32
    return %arg0, %arg1, %c0_i32, %c0_i32_0 : i32, i32, i32, i32
  }
  func.func @transform_1(%arg0: i32, %arg1: i32) -> (i32, i32) {
    %c0_i32 = arith.constant 0 : i32
    %c0_i32_0 = arith.constant 0 : i32
    %c0_i32_1 = arith.constant 0 : i32
    return %c0_i32, %c0_i32_0 : i32, i32
  }
  func.func @transform_2(%arg0: i32, %arg1: i32) -> (i32, i32) {
    %c0_i32 = arith.constant 0 : i32
    %c0_i32_0 = arith.constant 0 : i32
    %c0_i32_1 = arith.constant 0 : i32
    return %c0_i32, %c0_i32_0 : i32, i32
  }
  func.func @transform_3(%arg0: i32, %arg1: i32) -> (i32, i32, i32) {
    %c0_i32 = arith.constant 0 : i32
    %c0_i32_0 = arith.constant 0 : i32
    return %arg0, %c0_i32, %arg1 : i32, i32, i32
  }
}

</mosaic_0001>

<llo_original>
// kernel: _forward_impl.1
$region0: #{_forward_impl.1}
  #allocation0 [shape = 'u32[]', space=smem, size = 0x4, offset = 0x4, fixed_abs, tag = 'smem constant byte address 0x4 - core index']
  #allocation1 [shape = 'u32[144,128]{1,0:T(1,128)}', space=vmem, size = 0x12000, scoped, tag = 'internal scratch']
  #allocation2 [shape = 'f32[1,1]{1,0:T(1,128)}', space=vmem, size = 0x200, scoped, tag = 'scratch operand']
  #allocation3 [shape = 'f32[1,1]{1,0:T(1,128)}', space=vmem, size = 0x200, scoped, tag = 'scratch operand']
  %s0 = inlined_call_operand.vmem [shape: f32[2,1,131,32], index: 0, kind: input, shape index: {}]
  %s1 = inlined_call_operand.vmem [shape: f32[128,128], index: 1, kind: input, shape index: {}]
  %s2 = inlined_call_operand.vmem [shape: f32[128,4], index: 2, kind: input, shape index: {}]
  %s3 = inlined_call_operand.hbm [shape: f32[2,128,128], index: 3, kind: output, shape index: {}]
  %s4 = sld [smem:[#allocation0]]
  $region49: #{_forward_impl.1} parent=0
    _
  %s6 = ssub.s32 1, %s4
  %s7 = scalar_select 0, %s6, %s4
  $region1: #{_forward_impl.1} parent=0
    #allocation4 [shape = 'u8[131072]{0}', space=vmem, size = 0x20000, scoped, tag = 'output window, operand 0']
    #allocation5 [shape = 's32[2]{0}', space=sflag, size = 0x8, scoped, tag = 'scoped memory for _forward_impl.1']
    %8 = vsyncpa [#allocation5], 0
    %s9 = scalar_lea.sflag [#allocation5], 1
    %10 = vsyncpa %s9, 0
    loop: start=0, step=1, limit=4
    $region2: #{_forward_impl.1} parent=1 // loop_pre_header
      _
    $region3: #{_forward_impl.1} parent=1 // loop_header
      %s12 = sphi 0, %s16
      %p13 = scmp.ge.s32.totalorder %s12, 4
      %s19 = sphi 0, %s31
      %s20 = sphi 0, %s27
      %s21 = sphi 0, %s19
      %s22 = sphi 0, %s20
      %s23 = sphi 0, %s21
      %s24 = sphi 0, %s22
      %s36 = sphi 0, %s38
      %s39 = sphi 0, %s36
      %s40 = sphi 0, %s39
      %s56 = sphi 0, %s40
      %s60 = sphi 0, %s60
      %s62 = sphi 0, %s60
      %s63 = sphi 0, %s62
      %s77 = sphi 0, %s63
      %s81 = sphi 0, %s81
      %s83 = sphi 0, %s81
      %s84 = sphi 0, %s83
      %s98 = sphi 0, %s84
      %s106 = sphi 0, %s108
      %s109 = sphi 0, %s106
      %s110 = sphi 0, %s109
      %s126 = sphi 0, %s110
    $region4: #{_forward_impl.1} parent=1 // loop_header_branch
      %15 = sbr.rel (%p13) target = $region8
    $region5: #{_forward_impl.1} parent=1 // loop_body
      %s17 = ssub.s32 %s12, 1
      %s18 = ssub.s32 %s12, 2
      %s25 = sadd.s32 1, %s20
      %p26 = scmp.ge.s32.totalorder %s25, 1
      %s27 = scalar_select %p26, 0, %s25
      %s28 = sadd.s32 1, %s19
      %s29 = scalar_select %p26, %s28, %s19
      %p30 = scmp.ge.s32.totalorder %s29, 2
      %s31 = scalar_select %p30, 0, %s29
      %s32 = ssub.s32 %s19, %s31
      %s33 = ssub.s32 %s20, %s27
      %s34 = sor.u32 %s32, %s33
      %p35 = scmp.eq.s32.totalorder %s34, 0
      %s37 = sadd.s32 %s36, 1
      %s38 = scalar_select %p35, %s36, %s37
      %p41 = pneg %p35
      %p42 = scmp.eq.s32.totalorder %s12, 1
      %p43 = por %p41, %p42
      %p44 = scmp.ne.s32.totalorder %s36, %s39
      %p45 = scmp.eq.s32.totalorder %s12, 0
      %p46 = por %p44, %p45
      %p47 = scmp.ne.s32.totalorder %s36, %s39
      %p48 = scmp.eq.s32.totalorder %s17, 1
      %p49 = por %p47, %p48
      %p50 = scmp.ne.s32.totalorder %s39, %s40
      %p51 = scmp.eq.s32.totalorder %s17, 0
      %p52 = por %p50, %p51
      %p53 = scmp.ne.s32.totalorder %s39, %s40
      %p54 = scmp.eq.s32.totalorder %s18, 1
      %p55 = por %p53, %p54
      %p57 = scmp.ne.s32.totalorder %s40, %s56
      %p58 = scmp.eq.s32.totalorder %s18, 0
      %p59 = por %p57, %p58
      %s61 = sadd.s32 %s60, 1
      %p64 = scmp.eq.s32.totalorder %s12, 1
      %p65 = scmp.ne.s32.totalorder %s60, %s62
      %p66 = scmp.eq.s32.totalorder %s12, 0
      %p67 = por %p65, %p66
      %p68 = scmp.ne.s32.totalorder %s60, %s62
      %p69 = scmp.eq.s32.totalorder %s17, 1
      %p70 = por %p68, %p69
      %p71 = scmp.ne.s32.totalorder %s62, %s63
      %p72 = scmp.eq.s32.totalorder %s17, 0
      %p73 = por %p71, %p72
      %p74 = scmp.ne.s32.totalorder %s62, %s63
      %p75 = scmp.eq.s32.totalorder %s18, 1
      %p76 = por %p74, %p75
      %p78 = scmp.ne.s32.totalorder %s63, %s77
      %p79 = scmp.eq.s32.totalorder %s18, 0
      %p80 = por %p78, %p79
      %s82 = sadd.s32 %s81, 1
      %p85 = scmp.eq.s32.totalorder %s12, 1
      %p86 = scmp.ne.s32.totalorder %s81, %s83
      %p87 = scmp.eq.s32.totalorder %s12, 0
      %p88 = por %p86, %p87
      %p89 = scmp.ne.s32.totalorder %s81, %s83
      %p90 = scmp.eq.s32.totalorder %s17, 1
      %p91 = por %p89, %p90
      %p92 = scmp.ne.s32.totalorder %s83, %s84
      %p93 = scmp.eq.s32.totalorder %s17, 0
      %p94 = por %p92, %p93
      %p95 = scmp.ne.s32.totalorder %s83, %s84
      %p96 = scmp.eq.s32.totalorder %s18, 1
      %p97 = por %p95, %p96
      %p99 = scmp.ne.s32.totalorder %s84, %s98
      %p100 = scmp.eq.s32.totalorder %s18, 0
      %p101 = por %p99, %p100
      %s102 = ssub.s32 %s19, %s31
      %s103 = ssub.s32 %s20, %s27
      %s104 = sor.u32 %s102, %s103
      %p105 = scmp.eq.s32.totalorder %s104, 0
      %s107 = sadd.s32 %s106, 1
      %s108 = scalar_select %p105, %s106, %s107
      %p111 = pneg %p105
      %p112 = scmp.eq.s32.totalorder %s12, 1
      %p113 = por %p111, %p112
      %p114 = scmp.ne.s32.totalorder %s106, %s109
      %p115 = scmp.eq.s32.totalorder %s12, 0
      %p116 = por %p114, %p115
      %p117 = scmp.ne.s32.totalorder %s106, %s109
      %p118 = scmp.eq.s32.totalorder %s17, 1
      %p119 = por %p117, %p118
      %p120 = scmp.ne.s32.totalorder %s109, %s110
      %p121 = scmp.eq.s32.totalorder %s17, 0
      %p122 = por %p120, %p121
      %p123 = scmp.ne.s32.totalorder %s109, %s110
      %p124 = scmp.eq.s32.totalorder %s18, 1
      %p125 = por %p123, %p124
      %p127 = scmp.ne.s32.totalorder %s110, %s126
      %p128 = scmp.eq.s32.totalorder %s18, 0
      %p129 = por %p127, %p128
      %p130 = scmp.le.s32.totalorder 1, %s12
      %p131 = scmp.lt.s32.totalorder %s12, 3
      %p132 = pnand %p130, %p131
      %p133 = pneg %p132
      // Predicated region
      $region9: #{_forward_impl.1} parent=5 // pred_check
        _
      $region10: #{_forward_impl.1} parent=5 // pred_check_branch
        %135 = sbr.rel (%p132) target = $region12
      $region11: #{_forward_impl.1} parent=5 // pred_region
        %s136 = ssub.s32 %s12, 1
        // Predicated region
        $region13: #{_forward_impl.1} parent=11 // pred_check
          %p137 = pneg %p73
        $region14: #{_forward_impl.1} parent=11 // pred_check_branch
          %139 = sbr.rel (%p137) target = $region16
        $region15: #{_forward_impl.1} parent=11 // pred_region
          _
        $region16: #{_forward_impl.1} parent=11 // pred_fallthru
          _
        // Predicated region
        $region17: #{_forward_impl.1} parent=11 // pred_check
          %p140 = pneg %p94
        $region18: #{_forward_impl.1} parent=11 // pred_check_branch
          %142 = sbr.rel (%p140) target = $region20
        $region19: #{_forward_impl.1} parent=11 // pred_region
          _
        $region20: #{_forward_impl.1} parent=11 // pred_fallthru
          _
      $region12: #{_forward_impl.1} parent=5 // pred_fallthru
        _
      %p143 = scmp.lt.s32.totalorder %s12, 2
      // Predicated region
      $region21: #{_forward_impl.1} parent=5 // pred_check
        %p144 = pneg %p143
      $region22: #{_forward_impl.1} parent=5 // pred_check_branch
        %146 = sbr.rel (%p144) target = $region24
      $region23: #{_forward_impl.1} parent=5 // pred_region
        // Predicated region
        $region25: #{_forward_impl.1} parent=23 // pred_check
          %p147 = pneg %p46
        $region26: #{_forward_impl.1} parent=23 // pred_check_branch
          %149 = sbr.rel (%p147) target = $region28
        $region27: #{_forward_impl.1} parent=23 // pred_region
          %p150 = scmp.lt.s32.totalorder %s19, 1
          %s151 = scalar_select %p150, %s19, 1
          %p152 = scmp.lt.s32.totalorder %s20, 0
          %s153 = scalar_select %p152, %s20, 0
          %s154 = smul.addr %s153, 17
          %s155 = smul.addr %s151, 17
          %s156 = sadd.s32 %s154, %s155
          %s157 = smul.addr %s156, 8
          %s158 = scalar_lea.vmem %s0, %s157
        $region28: #{_forward_impl.1} parent=23 // pred_fallthru
          _
      $region24: #{_forward_impl.1} parent=5 // pred_fallthru
        _
      %p159 = scmp.le.s32.totalorder 1, %s12
      %p160 = scmp.lt.s32.totalorder %s12, 3
      %p161 = pnand %p159, %p160
      %p162 = pneg %p161
      // Predicated region
      $region29: #{_forward_impl.1} parent=5 // pred_check
        _
      $region30: #{_forward_impl.1} parent=5 // pred_check_branch
        %164 = sbr.rel (%p161) target = $region32
      $region31: #{_forward_impl.1} parent=5 // pred_region
        %s165 = ssub.s32 %s12, 1
        %p166 = scmp.lt.s32.totalorder %s21, 1
        %s167 = scalar_select %p166, %s21, 1
        %p168 = scmp.lt.s32.totalorder %s22, 0
        %s169 = scalar_select %p168, %s22, 0
        %s170 = smul.addr %s169, 17
        %s171 = smul.addr %s167, 17
        %s172 = sadd.s32 %s170, %s171
        %s173 = smul.addr %s172, 8
        %s174 = scalar_lea.vmem %s0, %s173
        %p175 = pneg %p52
        %p176 = pneg %p49
        %p177 = pneg %p73
        %p178 = pneg %p70
        %p179 = pneg %p94
        %p180 = pneg %p91
        %p181 = pneg %p122
        %p182 = pneg %p119
        %s183 = sand.u32 %s109, 1
        %s184 = scalar_lea.sflag [#allocation5], %s183
        %s185 = sand.u32 %s109, 1
        %s186 = smul.addr %s185, 128
        %s187 = scalar_lea.vmem [#allocation4], %s186
        %p188 = scmp.lt.s32.totalorder %s21, 1
        %s189 = scalar_select %p188, %s21, 1
        %p190 = scmp.lt.s32.totalorder %s22, 0
        %s191 = scalar_select %p190, %s22, 0
        %s192 = smul.addr %s191, 17
        %s193 = smul.addr %s189, 17
        %s194 = sadd.s32 %s192, %s193
        %s195 = smul.addr %s194, 8
        %s196 = scalar_lea.vmem %s0, %s195
        %p197 = scmp.eq.s32.totalorder %s22, 0
        // Predicated region
        $region33: #{_forward_impl.1} parent=31 // pred_check
          %p198 = pneg %p197
        $region34: #{_forward_impl.1} parent=31 // pred_check_branch
          %200 = sbr.rel (%p198) target = $region36
        $region35: #{_forward_impl.1} parent=31 // pred_region
          %vm201 = vcmask 0
          %202 = vst.msk [vmem:[#allocation2] sm:$0x1] %vm201, 0.0
          %203 = vst.msk [vmem:[#allocation3] sm:$0x1] %vm201, 0.0
        $region36: #{_forward_impl.1} parent=31 // pred_fallthru
          _
        %v204 = vld [vmem:[%s196] sm:$0xff]
        %v205 = vld [vmem:[%s196 + $0x8] sm:$0xff]
        %v206 = vld [vmem:[%s196 + $0x10] sm:$0xff]
        %v207 = vld [vmem:[%s196 + $0x18] sm:$0xff]
        %v208 = vld [vmem:[%s196 + $0x20] sm:$0xff]
        %v209 = vld [vmem:[%s196 + $0x28] sm:$0xff]
        %v210 = vld [vmem:[%s196 + $0x30] sm:$0xff]
        %v211 = vld [vmem:[%s196 + $0x38] sm:$0xff]
        %v212 = vld [vmem:[%s196 + $0x40] sm:$0xff]
        %v213 = vld [vmem:[%s196 + $0x48] sm:$0xff]
        %v214 = vld [vmem:[%s196 + $0x50] sm:$0xff]
        %v215 = vld [vmem:[%s196 + $0x58] sm:$0xff]
        %v216 = vld [vmem:[%s196 + $0x60] sm:$0xff]
        %v217 = vld [vmem:[%s196 + $0x68] sm:$0xff]
        %v218 = vld [vmem:[%s196 + $0x70] sm:$0xff]
        %v219 = vld [vmem:[%s196 + $0x78] sm:$0xff]
        %v220 = vld [vmem:[%s196 + $0x1] sm:$0xff]
        %v221 = vld [vmem:[%s196 + $0x9] sm:$0xff]
        %v222 = vld [vmem:[%s196 + $0x11] sm:$0xff]
        %v223 = vld [vmem:[%s196 + $0x19] sm:$0xff]
        %v224 = vld [vmem:[%s196 + $0x21] sm:$0xff]
        %v225 = vld [vmem:[%s196 + $0x29] sm:$0xff]
        %v226 = vld [vmem:[%s196 + $0x31] sm:$0xff]
        %v227 = vld [vmem:[%s196 + $0x39] sm:$0xff]
        %v228 = vld [vmem:[%s196 + $0x41] sm:$0xff]
        %v229 = vld [vmem:[%s196 + $0x49] sm:$0xff]
        %v230 = vld [vmem:[%s196 + $0x51] sm:$0xff]
        %v231 = vld [vmem:[%s196 + $0x59] sm:$0xff]
        %v232 = vld [vmem:[%s196 + $0x61] sm:$0xff]
        %v233 = vld [vmem:[%s196 + $0x69] sm:$0xff]
        %v234 = vld [vmem:[%s196 + $0x71] sm:$0xff]
        %v235 = vld [vmem:[%s196 + $0x79] sm:$0xff]
        %v236 = vld [vmem:[%s196 + $0x2] sm:$0xff]
        %v237 = vld [vmem:[%s196 + $0xa] sm:$0xff]
        %v238 = vld [vmem:[%s196 + $0x12] sm:$0xff]
        %v239 = vld [vmem:[%s196 + $0x1a] sm:$0xff]
        %v240 = vld [vmem:[%s196 + $0x22] sm:$0xff]
        %v241 = vld [vmem:[%s196 + $0x2a] sm:$0xff]
        %v242 = vld [vmem:[%s196 + $0x32] sm:$0xff]
        %v243 = vld [vmem:[%s196 + $0x3a] sm:$0xff]
        %v244 = vld [vmem:[%s196 + $0x42] sm:$0xff]
        %v245 = vld [vmem:[%s196 + $0x4a] sm:$0xff]
        %v246 = vld [vmem:[%s196 + $0x52] sm:$0xff]
        %v247 = vld [vmem:[%s196 + $0x5a] sm:$0xff]
        %v248 = vld [vmem:[%s196 + $0x62] sm:$0xff]
        %v249 = vld [vmem:[%s196 + $0x6a] sm:$0xff]
        %v250 = vld [vmem:[%s196 + $0x72] sm:$0xff]
        %v251 = vld [vmem:[%s196 + $0x7a] sm:$0xff]
        %v252 = vld [vmem:[%s196 + $0x3] sm:$0xff]
        %v253 = vld [vmem:[%s196 + $0xb] sm:$0xff]
        %v254 = vld [vmem:[%s196 + $0x13] sm:$0xff]
        %v255 = vld [vmem:[%s196 + $0x1b] sm:$0xff]
        %v256 = vld [vmem:[%s196 + $0x23] sm:$0xff]
        %v257 = vld [vmem:[%s196 + $0x2b] sm:$0xff]
        %v258 = vld [vmem:[%s196 + $0x33] sm:$0xff]
        %v259 = vld [vmem:[%s196 + $0x3b] sm:$0xff]
        %v260 = vld [vmem:[%s196 + $0x43] sm:$0xff]
        %v261 = vld [vmem:[%s196 + $0x4b] sm:$0xff]
        %v262 = vld [vmem:[%s196 + $0x53] sm:$0xff]
        %v263 = vld [vmem:[%s196 + $0x5b] sm:$0xff]
        %v264 = vld [vmem:[%s196 + $0x63] sm:$0xff]
        %v265 = vld [vmem:[%s196 + $0x6b] sm:$0xff]
        %v266 = vld [vmem:[%s196 + $0x73] sm:$0xff]
        %v267 = vld [vmem:[%s196 + $0x7b] sm:$0xff]
        %284 = vrot.lane.b32.xlu0 %v220, 32
        %v285 = vpop.permute.xlu0 %284
        %286 = vrot.lane.b32.xlu0 %v221, 32
        %v287 = vpop.permute.xlu0 %286
        %288 = vrot.lane.b32.xlu0 %v222, 32
        %v289 = vpop.permute.xlu0 %288
        %290 = vrot.lane.b32.xlu0 %v223, 32
        %v291 = vpop.permute.xlu0 %290
        %292 = vrot.lane.b32.xlu0 %v224, 32
        %v293 = vpop.permute.xlu0 %292
        %294 = vrot.lane.b32.xlu0 %v225, 32
        %v295 = vpop.permute.xlu0 %294
        %296 = vrot.lane.b32.xlu0 %v226, 32
        %v297 = vpop.permute.xlu0 %296
        %298 = vrot.lane.b32.xlu0 %v227, 32
        %v299 = vpop.permute.xlu0 %298
        %300 = vrot.lane.b32.xlu0 %v228, 32
        %v301 = vpop.permute.xlu0 %300
        %302 = vrot.lane.b32.xlu0 %v229, 32
        %v303 = vpop.permute.xlu0 %302
        %304 = vrot.lane.b32.xlu0 %v230, 32
        %v305 = vpop.permute.xlu0 %304
        %306 = vrot.lane.b32.xlu0 %v231, 32
        %v307 = vpop.permute.xlu0 %306
        %308 = vrot.lane.b32.xlu0 %v232, 32
        %v309 = vpop.permute.xlu0 %308
        %310 = vrot.lane.b32.xlu0 %v233, 32
        %v311 = vpop.permute.xlu0 %310
        %312 = vrot.lane.b32.xlu0 %v234, 32
        %v313 = vpop.permute.xlu0 %312
        %314 = vrot.lane.b32.xlu0 %v235, 32
        %v315 = vpop.permute.xlu0 %314
        %348 = vrot.lane.b32.xlu0 %v236, 64
        %v349 = vpop.permute.xlu0 %348
        %350 = vrot.lane.b32.xlu0 %v237, 64
        %v351 = vpop.permute.xlu0 %350
        %352 = vrot.lane.b32.xlu0 %v238, 64
        %v353 = vpop.permute.xlu0 %352
        %354 = vrot.lane.b32.xlu0 %v239, 64
        %v355 = vpop.permute.xlu0 %354
        %356 = vrot.lane.b32.xlu0 %v240, 64
        %v357 = vpop.permute.xlu0 %356
        %358 = vrot.lane.b32.xlu0 %v241, 64
        %v359 = vpop.permute.xlu0 %358
        %360 = vrot.lane.b32.xlu0 %v242, 64
        %v361 = vpop.permute.xlu0 %360
        %362 = vrot.lane.b32.xlu0 %v243, 64
        %v363 = vpop.permute.xlu0 %362
        %364 = vrot.lane.b32.xlu0 %v244, 64
        %v365 = vpop.permute.xlu0 %364
        %366 = vrot.lane.b32.xlu0 %v245, 64
        %v367 = vpop.permute.xlu0 %366
        %368 = vrot.lane.b32.xlu0 %v246, 64
        %v369 = vpop.permute.xlu0 %368
        %370 = vrot.lane.b32.xlu0 %v247, 64
        %v371 = vpop.permute.xlu0 %370
        %372 = vrot.lane.b32.xlu0 %v248, 64
        %v373 = vpop.permute.xlu0 %372
        %374 = vrot.lane.b32.xlu0 %v249, 64
        %v375 = vpop.permute.xlu0 %374
        %376 = vrot.lane.b32.xlu0 %v250, 64
        %v377 = vpop.permute.xlu0 %376
        %378 = vrot.lane.b32.xlu0 %v251, 64
        %v379 = vpop.permute.xlu0 %378
        %412 = vrot.lane.b32.xlu0 %v252, 96
        %v413 = vpop.permute.xlu0 %412
        %414 = vrot.lane.b32.xlu0 %v253, 96
        %v415 = vpop.permute.xlu0 %414
        %416 = vrot.lane.b32.xlu0 %v254, 96
        %v417 = vpop.permute.xlu0 %416
        %418 = vrot.lane.b32.xlu0 %v255, 96
        %v419 = vpop.permute.xlu0 %418
        %420 = vrot.lane.b32.xlu0 %v256, 96
        %v421 = vpop.permute.xlu0 %420
        %422 = vrot.lane.b32.xlu0 %v257, 96
        %v423 = vpop.permute.xlu0 %422
        %424 = vrot.lane.b32.xlu0 %v258, 96
        %v425 = vpop.permute.xlu0 %424
        %426 = vrot.lane.b32.xlu0 %v259, 96
        %v427 = vpop.permute.xlu0 %426
        %428 = vrot.lane.b32.xlu0 %v260, 96
        %v429 = vpop.permute.xlu0 %428
        %430 = vrot.lane.b32.xlu0 %v261, 96
        %v431 = vpop.permute.xlu0 %430
        %432 = vrot.lane.b32.xlu0 %v262, 96
        %v433 = vpop.permute.xlu0 %432
        %434 = vrot.lane.b32.xlu0 %v263, 96
        %v435 = vpop.permute.xlu0 %434
        %436 = vrot.lane.b32.xlu0 %v264, 96
        %v437 = vpop.permute.xlu0 %436
        %438 = vrot.lane.b32.xlu0 %v265, 96
        %v439 = vpop.permute.xlu0 %438
        %440 = vrot.lane.b32.xlu0 %v266, 96
        %v441 = vpop.permute.xlu0 %440
        %442 = vrot.lane.b32.xlu0 %v267, 96
        %v443 = vpop.permute.xlu0 %442
        %vm460 = vcmask 261120
        %v461 = vsel %vm460, %v204, %v285
        %v462 = vsel %vm460, %v205, %v287
        %v463 = vsel %vm460, %v206, %v289
        %v464 = vsel %vm460, %v207, %v291
        %v465 = vsel %vm460, %v208, %v293
        %v466 = vsel %vm460, %v209, %v295
        %v467 = vsel %vm460, %v210, %v297
        %v468 = vsel %vm460, %v211, %v299
        %v469 = vsel %vm460, %v212, %v301
        %v470 = vsel %vm460, %v213, %v303
        %v471 = vsel %vm460, %v214, %v305
        %v472 = vsel %vm460, %v215, %v307
        %v473 = vsel %vm460, %v216, %v309
        %v474 = vsel %vm460, %v217, %v311
        %v475 = vsel %vm460, %v218, %v313
        %v476 = vsel %vm460, %v219, %v315
        %vm477 = vcmask 523264
        %v478 = vsel %vm477, %v461, %v349
        %v479 = vsel %vm477, %v462, %v351
        %v480 = vsel %vm477, %v463, %v353
        %v481 = vsel %vm477, %v464, %v355
        %v482 = vsel %vm477, %v465, %v357
        %v483 = vsel %vm477, %v466, %v359
        %v484 = vsel %vm477, %v467, %v361
        %v485 = vsel %vm477, %v468, %v363
        %v486 = vsel %vm477, %v469, %v365
        %v487 = vsel %vm477, %v470, %v367
        %v488 = vsel %vm477, %v471, %v369
        %v489 = vsel %vm477, %v472, %v371
        %v490 = vsel %vm477, %v473, %v373
        %v491 = vsel %vm477, %v474, %v375
        %v492 = vsel %vm477, %v475, %v377
        %v493 = vsel %vm477, %v476, %v379
        %vm494 = vcmask 785408
        %v495 = vsel %vm494, %v478, %v413
        %v496 = vsel %vm494, %v479, %v415
        %v497 = vsel %vm494, %v480, %v417
        %v498 = vsel %vm494, %v481, %v419
        %v499 = vsel %vm494, %v482, %v421
        %v500 = vsel %vm494, %v483, %v423
        %v501 = vsel %vm494, %v484, %v425
        %v502 = vsel %vm494, %v485, %v427
        %v503 = vsel %vm494, %v486, %v429
        %v504 = vsel %vm494, %v487, %v431
        %v505 = vsel %vm494, %v488, %v433
        %v506 = vsel %vm494, %v489, %v435
        %v507 = vsel %vm494, %v490, %v437
        %v508 = vsel %vm494, %v491, %v439
        %v509 = vsel %vm494, %v492, %v441
        %v510 = vsel %vm494, %v493, %v443
        %v511 = vld [vmem:[%s1] sm:$0xff]
        %v512 = vld [vmem:[%s1 + $0x8] sm:$0xff]
        %v513 = vld [vmem:[%s1 + $0x10] sm:$0xff]
        %v514 = vld [vmem:[%s1 + $0x18] sm:$0xff]
        %v515 = vld [vmem:[%s1 + $0x20] sm:$0xff]
        %v516 = vld [vmem:[%s1 + $0x28] sm:$0xff]
        %v517 = vld [vmem:[%s1 + $0x30] sm:$0xff]
        %v518 = vld [vmem:[%s1 + $0x38] sm:$0xff]
        %v519 = vld [vmem:[%s1 + $0x40] sm:$0xff]
        %v520 = vld [vmem:[%s1 + $0x48] sm:$0xff]
        %v521 = vld [vmem:[%s1 + $0x50] sm:$0xff]
        %v522 = vld [vmem:[%s1 + $0x58] sm:$0xff]
        %v523 = vld [vmem:[%s1 + $0x60] sm:$0xff]
        %v524 = vld [vmem:[%s1 + $0x68] sm:$0xff]
        %v525 = vld [vmem:[%s1 + $0x70] sm:$0xff]
        %v526 = vld [vmem:[%s1 + $0x78] sm:$0xff]
        %527 = vmatprep.subr.mxu0 0.0
        %528 = vmatpush1.msra.mxu0 %v526
        %529 = vmatprep.subr.mxu0 0.0
        %530 = vmatpush1.msra.mxu0 %v525
        %531 = vmatprep.subr.mxu0 0.0
        %532 = vmatpush1.msra.mxu0 %v524
        %533 = vmatprep.subr.mxu0 0.0
        %534 = vmatpush1.msra.mxu0 %v523
        %535 = vmatprep.subr.mxu0 0.0
        %536 = vmatpush1.msra.mxu0 %v522
        %537 = vmatprep.subr.mxu0 0.0
        %538 = vmatpush1.msra.mxu0 %v521
        %539 = vmatprep.subr.mxu0 0.0
        %540 = vmatpush1.msra.mxu0 %v520
        %541 = vmatprep.subr.mxu0 0.0
        %542 = vmatpush1.msra.mxu0 %v519
        %543 = vmatprep.subr.mxu0 0.0
        %544 = vmatpush1.msra.mxu0 %v518
        %545 = vmatprep.subr.mxu0 0.0
        %546 = vmatpush1.msra.mxu0 %v517
        %547 = vmatprep.subr.mxu0 0.0
        %548 = vmatpush1.msra.mxu0 %v516
        %549 = vmatprep.subr.mxu0 0.0
        %550 = vmatpush1.msra.mxu0 %v515
        %551 = vmatprep.subr.mxu0 0.0
        %552 = vmatpush1.msra.mxu0 %v514
        %553 = vmatprep.subr.mxu0 0.0
        %554 = vmatpush1.msra.mxu0 %v513
        %555 = vmatprep.subr.mxu0 0.0
        %556 = vmatpush1.msra.mxu0 %v512
        %557 = vmatprep.subr.mxu0 0.0
        %558 = vmatpush1.msra.mxu0 %v511
        %559 = vmatprep.subr.mxu0 0.0
        %560 = vmatpush2.msra.mxu0 0.0
        %561 = vmatprep.subr.mxu0 0.0
        %562 = vmatpush2.msra.mxu0 0.0
        %563 = vmatprep.subr.mxu0 0.0
        %564 = vmatpush2.msra.mxu0 0.0
        %565 = vmatprep.subr.mxu0 0.0
        %566 = vmatpush2.msra.mxu0 0.0
        %567 = vmatprep.subr.mxu0 0.0
        %568 = vmatpush2.msra.mxu0 0.0
        %569 = vmatprep.subr.mxu0 0.0
        %570 = vmatpush2.msra.mxu0 0.0
        %571 = vmatprep.subr.mxu0 0.0
        %572 = vmatpush2.msra.mxu0 0.0
        %573 = vmatprep.subr.mxu0 0.0
        %574 = vmatpush2.msra.mxu0 0.0
        %575 = vmatprep.subr.mxu0 0.0
        %576 = vmatpush2.msra.mxu0 0.0
        %577 = vmatprep.subr.mxu0 0.0
        %578 = vmatpush2.msra.mxu0 0.0
        %579 = vmatprep.subr.mxu0 0.0
        %580 = vmatpush2.msra.mxu0 0.0
        %581 = vmatprep.subr.mxu0 0.0
        %582 = vmatpush2.msra.mxu0 0.0
        %583 = vmatprep.subr.mxu0 0.0
        %584 = vmatpush2.msra.mxu0 0.0
        %585 = vmatprep.subr.mxu0 0.0
        %586 = vmatpush2.msra.mxu0 0.0
        %587 = vmatprep.subr.mxu0 0.0
        %588 = vmatpush2.msra.mxu0 0.0
        %589 = vmatprep.subr.mxu0 0.0
        %590 = vmatpush2.msra.mxu0 0.0
        %591 = vmatprep.mubr.f32.mxu0 0.0
        %592 = vmatmul.mubr.f32.gmra.mxu0 %v495
        %v593 = vpop.f32.mrf.mxu0
        %v594 = vadd.f32 0.0, %v593
        %v595 = vpop.f32.mrf.mxu0
        %596 = vmatprep.mubr.f32.mxu0 0.0
        %597 = vmatmul.mubr.f32.gmra.mxu0 %v496
        %v598 = vpop.f32.mrf.mxu0
        %v599 = vadd.f32 0.0, %v598
        %v600 = vpop.f32.mrf.mxu0
        %601 = vmatprep.mubr.f32.mxu0 0.0
        %602 = vmatmul.mubr.f32.gmra.mxu0 %v497
        %v603 = vpop.f32.mrf.mxu0
        %v604 = vadd.f32 0.0, %v603
        %v605 = vpop.f32.mrf.mxu0
        %606 = vmatprep.mubr.f32.mxu0 0.0
        %607 = vmatmul.mubr.f32.gmra.mxu0 %v498
        %v608 = vpop.f32.mrf.mxu0
        %v609 = vadd.f32 0.0, %v608
        %v610 = vpop.f32.mrf.mxu0
        %611 = vmatprep.mubr.f32.mxu0 0.0
        %612 = vmatmul.mubr.f32.gmra.mxu0 %v499
        %v613 = vpop.f32.mrf.mxu0
        %v614 = vadd.f32 0.0, %v613
        %v615 = vpop.f32.mrf.mxu0
        %616 = vmatprep.mubr.f32.mxu0 0.0
        %617 = vmatmul.mubr.f32.gmra.mxu0 %v500
        %v618 = vpop.f32.mrf.mxu0
        %v619 = vadd.f32 0.0, %v618
        %v620 = vpop.f32.mrf.mxu0
        %621 = vmatprep.mubr.f32.mxu0 0.0
        %622 = vmatmul.mubr.f32.gmra.mxu0 %v501
        %v623 = vpop.f32.mrf.mxu0
        %v624 = vadd.f32 0.0, %v623
        %v625 = vpop.f32.mrf.mxu0
        %626 = vmatprep.mubr.f32.mxu0 0.0
        %627 = vmatmul.mubr.f32.gmra.mxu0 %v502
        %v628 = vpop.f32.mrf.mxu0
        %v629 = vadd.f32 0.0, %v628
        %v630 = vpop.f32.mrf.mxu0
        %631 = vmatprep.mubr.f32.mxu0 0.0
        %632 = vmatmul.mubr.f32.gmra.mxu0 %v503
        %v633 = vpop.f32.mrf.mxu0
        %v634 = vadd.f32 0.0, %v633
        %v635 = vpop.f32.mrf.mxu0
        %636 = vmatprep.mubr.f32.mxu0 0.0
        %637 = vmatmul.mubr.f32.gmra.mxu0 %v504
        %v638 = vpop.f32.mrf.mxu0
        %v639 = vadd.f32 0.0, %v638
        %v640 = vpop.f32.mrf.mxu0
        %641 = vmatprep.mubr.f32.mxu0 0.0
        %642 = vmatmul.mubr.f32.gmra.mxu0 %v505
        %v643 = vpop.f32.mrf.mxu0
        %v644 = vadd.f32 0.0, %v643
        %v645 = vpop.f32.mrf.mxu0
        %646 = vmatprep.mubr.f32.mxu0 0.0
        %647 = vmatmul.mubr.f32.gmra.mxu0 %v506
        %v648 = vpop.f32.mrf.mxu0
        %v649 = vadd.f32 0.0, %v648
        %v650 = vpop.f32.mrf.mxu0
        %651 = vmatprep.mubr.f32.mxu0 0.0
        %652 = vmatmul.mubr.f32.gmra.mxu0 %v507
        %v653 = vpop.f32.mrf.mxu0
        %v654 = vadd.f32 0.0, %v653
        %v655 = vpop.f32.mrf.mxu0
        %656 = vmatprep.mubr.f32.mxu0 0.0
        %657 = vmatmul.mubr.f32.gmra.mxu0 %v508
        %v658 = vpop.f32.mrf.mxu0
        %v659 = vadd.f32 0.0, %v658
        %v660 = vpop.f32.mrf.mxu0
        %661 = vmatprep.mubr.f32.mxu0 0.0
        %662 = vmatmul.mubr.f32.gmra.mxu0 %v509
        %v663 = vpop.f32.mrf.mxu0
        %v664 = vadd.f32 0.0, %v663
        %v665 = vpop.f32.mrf.mxu0
        %666 = vmatprep.mubr.f32.mxu0 0.0
        %667 = vmatmul.mubr.f32.gmra.mxu0 %v510
        %v668 = vpop.f32.mrf.mxu0
        %v669 = vadd.f32 0.0, %v668
        %v670 = vpop.f32.mrf.mxu0
        %671 = vdwg.mxu0
        %672 = vxpose.xlu0.b32.start [1/16] %v594, 128
        %673 = vxpose.xlu0.b32.cont [2/16] %v599, 128
        %674 = vxpose.xlu0.b32.cont [3/16] %v604, 128
        %675 = vxpose.xlu0.b32.cont [4/16] %v609, 128
        %676 = vxpose.xlu0.b32.cont [5/16] %v614, 128
        %677 = vxpose.xlu0.b32.cont [6/16] %v619, 128
        %678 = vxpose.xlu0.b32.cont [7/16] %v624, 128
        %679 = vxpose.xlu0.b32.cont [8/16] %v629, 128
        %680 = vxpose.xlu0.b32.cont [9/16] %v634, 128
        %681 = vxpose.xlu0.b32.cont [10/16] %v639, 128
        %682 = vxpose.xlu0.b32.cont [11/16] %v644, 128
        %683 = vxpose.xlu0.b32.cont [12/16] %v649, 128
        %684 = vxpose.xlu0.b32.cont [13/16] %v654, 128
        %685 = vxpose.xlu0.b32.cont [14/16] %v659, 128
        %686 = vxpose.xlu0.b32.cont [15/16] %v664, 128
        %687 = vxpose.xlu0.b32.end [16/16] %v669, 128
        %v688 = vpop.trf.xlu0
        %v689 = vpop.trf.xlu0
        %v690 = vpop.trf.xlu0
        %v691 = vpop.trf.xlu0
        %v692 = vpop.trf.xlu0
        %v693 = vpop.trf.xlu0
        %v694 = vpop.trf.xlu0
        %v695 = vpop.trf.xlu0
        %v696 = vpop.trf.xlu0
        %v697 = vpop.trf.xlu0
        %v698 = vpop.trf.xlu0
        %v699 = vpop.trf.xlu0
        %v700 = vpop.trf.xlu0
        %v701 = vpop.trf.xlu0
        %v702 = vpop.trf.xlu0
        %v703 = vpop.trf.xlu0
        %v704 = vld [vmem:[%s2] sm:$0xff]
        %v705 = vld [vmem:[%s2 + $0x8] sm:$0xff]
        %v706 = vld [vmem:[%s2 + $0x10] sm:$0xff]
        %v707 = vld [vmem:[%s2 + $0x18] sm:$0xff]
        %v708 = vld [vmem:[%s2 + $0x20] sm:$0xff]
        %v709 = vld [vmem:[%s2 + $0x28] sm:$0xff]
        %v710 = vld [vmem:[%s2 + $0x30] sm:$0xff]
        %v711 = vld [vmem:[%s2 + $0x38] sm:$0xff]
        %v712 = vld [vmem:[%s2 + $0x40] sm:$0xff]
        %v713 = vld [vmem:[%s2 + $0x48] sm:$0xff]
        %v714 = vld [vmem:[%s2 + $0x50] sm:$0xff]
        %v715 = vld [vmem:[%s2 + $0x58] sm:$0xff]
        %v716 = vld [vmem:[%s2 + $0x60] sm:$0xff]
        %v717 = vld [vmem:[%s2 + $0x68] sm:$0xff]
        %v718 = vld [vmem:[%s2 + $0x70] sm:$0xff]
        %v719 = vld [vmem:[%s2 + $0x78] sm:$0xff]
        %721 = vset.pattern.permute.xlu0 0
        %722 = vperm.xlu0 %721, %v704
        %v723 = vpop.permute.xlu0 %722
        %726 = vset.pattern.permute.xlu0 0
        %727 = vperm.xlu0 %726, %v705
        %v728 = vpop.permute.xlu0 %727
        %731 = vset.pattern.permute.xlu0 0
        %732 = vperm.xlu0 %731, %v706
        %v733 = vpop.permute.xlu0 %732
        %736 = vset.pattern.permute.xlu0 0
        %737 = vperm.xlu0 %736, %v707
        %v738 = vpop.permute.xlu0 %737
        %741 = vset.pattern.permute.xlu0 0
        %742 = vperm.xlu0 %741, %v708
        %v743 = vpop.permute.xlu0 %742
        %746 = vset.pattern.permute.xlu0 0
        %747 = vperm.xlu0 %746, %v709
        %v748 = vpop.permute.xlu0 %747
        %751 = vset.pattern.permute.xlu0 0
        %752 = vperm.xlu0 %751, %v710
        %v753 = vpop.permute.xlu0 %752
        %756 = vset.pattern.permute.xlu0 0
        %757 = vperm.xlu0 %756, %v711
        %v758 = vpop.permute.xlu0 %757
        %761 = vset.pattern.permute.xlu0 0
        %762 = vperm.xlu0 %761, %v712
        %v763 = vpop.permute.xlu0 %762
        %766 = vset.pattern.permute.xlu0 0
        %767 = vperm.xlu0 %766, %v713
        %v768 = vpop.permute.xlu0 %767
        %771 = vset.pattern.permute.xlu0 0
        %772 = vperm.xlu0 %771, %v714
        %v773 = vpop.permute.xlu0 %772
        %776 = vset.pattern.permute.xlu0 0
        %777 = vperm.xlu0 %776, %v715
        %v778 = vpop.permute.xlu0 %777
        %781 = vset.pattern.permute.xlu0 0
        %782 = vperm.xlu0 %781, %v716
        %v783 = vpop.permute.xlu0 %782
        %786 = vset.pattern.permute.xlu0 0
        %787 = vperm.xlu0 %786, %v717
        %v788 = vpop.permute.xlu0 %787
        %791 = vset.pattern.permute.xlu0 0
        %792 = vperm.xlu0 %791, %v718
        %v793 = vpop.permute.xlu0 %792
        %796 = vset.pattern.permute.xlu0 0
        %797 = vperm.xlu0 %796, %v719
        %v798 = vpop.permute.xlu0 %797
        %v800 = vadd.f32 %v688, %v723
        %v801 = vadd.f32 %v689, %v728
        %v802 = vadd.f32 %v690, %v733
        %v803 = vadd.f32 %v691, %v738
        %v804 = vadd.f32 %v692, %v743
        %v805 = vadd.f32 %v693, %v748
        %v806 = vadd.f32 %v694, %v753
        %v807 = vadd.f32 %v695, %v758
        %v808 = vadd.f32 %v696, %v763
        %v809 = vadd.f32 %v697, %v768
        %v810 = vadd.f32 %v698, %v773
        %v811 = vadd.f32 %v699, %v778
        %v812 = vadd.f32 %v700, %v783
        %v813 = vadd.f32 %v701, %v788
        %v814 = vadd.f32 %v702, %v793
        %v815 = vadd.f32 %v703, %v798
        %v816 = vadd.f32 %v800, %v801
        %v817 = vadd.f32 %v816, %v802
        %v818 = vadd.f32 %v817, %v803
        %v819 = vadd.f32 %v818, %v804
        %v820 = vadd.f32 %v819, %v805
        %v821 = vadd.f32 %v820, %v806
        %v822 = vadd.f32 %v821, %v807
        %v823 = vadd.f32 %v822, %v808
        %v824 = vadd.f32 %v823, %v809
        %v825 = vadd.f32 %v824, %v810
        %v826 = vadd.f32 %v825, %v811
        %v827 = vadd.f32 %v826, %v812
        %v828 = vadd.f32 %v827, %v813
        %v829 = vadd.f32 %v828, %v814
        %v830 = vadd.f32 %v829, %v815
        %v831 = vrot.slane %v830, 4
        %v832 = vadd.f32 %v830, %v831
        %v833 = vrot.slane %v832, 2
        %v834 = vadd.f32 %v832, %v833
        %v835 = vrot.slane %v834, 1
        %v836 = vadd.f32 %v834, %v835
        %v837 = vmul.f32 %v800, %v800
        %v838 = vmul.f32 %v801, %v801
        %v839 = vmul.f32 %v802, %v802
        %v840 = vmul.f32 %v803, %v803
        %v841 = vmul.f32 %v804, %v804
        %v842 = vmul.f32 %v805, %v805
        %v843 = vmul.f32 %v806, %v806
        %v844 = vmul.f32 %v807, %v807
        %v845 = vmul.f32 %v808, %v808
        %v846 = vmul.f32 %v809, %v809
        %v847 = vmul.f32 %v810, %v810
        %v848 = vmul.f32 %v811, %v811
        %v849 = vmul.f32 %v812, %v812
        %v850 = vmul.f32 %v813, %v813
        %v851 = vmul.f32 %v814, %v814
        %v852 = vmul.f32 %v815, %v815
        %v853 = vadd.f32 %v837, %v838
        %v854 = vadd.f32 %v853, %v839
        %v855 = vadd.f32 %v854, %v840
        %v856 = vadd.f32 %v855, %v841
        %v857 = vadd.f32 %v856, %v842
        %v858 = vadd.f32 %v857, %v843
        %v859 = vadd.f32 %v858, %v844
        %v860 = vadd.f32 %v859, %v845
        %v861 = vadd.f32 %v860, %v846
        %v862 = vadd.f32 %v861, %v847
        %v863 = vadd.f32 %v862, %v848
        %v864 = vadd.f32 %v863, %v849
        %v865 = vadd.f32 %v864, %v850
        %v866 = vadd.f32 %v865, %v851
        %v867 = vadd.f32 %v866, %v852
        %v868 = vrot.slane %v867, 4
        %v869 = vadd.f32 %v867, %v868
        %v870 = vrot.slane %v869, 2
        %v871 = vadd.f32 %v869, %v870
        %v872 = vrot.slane %v871, 1
        %v873 = vadd.f32 %v871, %v872
        %vm874 = vcmask 1040384
        %v875 = vsel %vm874, %v836, %v873
        %877 = vrot.lane.b32.xlu0 %v875, 1
        %v878 = vpop.permute.xlu0 %877
        %vm880 = vcmask 7168
        %v881 = vsel %vm880, 0.0, %v878
        %v882 = vadd.f32 %v875, %v881
        %884 = vrot.lane.b32.xlu0 %v882, 2
        %v885 = vpop.permute.xlu0 %884
        %vm887 = vcmask 15360
        %v888 = vsel %vm887, 0.0, %v885
        %v889 = vadd.f32 %v882, %v888
        %891 = vrot.lane.b32.xlu0 %v889, 4
        %v892 = vpop.permute.xlu0 %891
        %vm894 = vcmask 31744
        %v895 = vsel %vm894, 0.0, %v892
        %v896 = vadd.f32 %v889, %v895
        %898 = vrot.lane.b32.xlu0 %v896, 8
        %v899 = vpop.permute.xlu0 %898
        %vm901 = vcmask 64512
        %v902 = vsel %vm901, 0.0, %v899
        %v903 = vadd.f32 %v896, %v902
        %905 = vrot.lane.b32.xlu0 %v903, 16
        %v906 = vpop.permute.xlu0 %905
        %vm908 = vcmask 130048
        %v909 = vsel %vm908, 0.0, %v906
        %v910 = vadd.f32 %v903, %v909
        %912 = vrot.lane.b32.xlu0 %v910, 32
        %v913 = vpop.permute.xlu0 %912
        %v915 = vsel %vm460, 0.0, %v913
        %v916 = vadd.f32 %v910, %v915
        %918 = vrot.lane.b32.xlu0 %v916, 64
        %v919 = vpop.permute.xlu0 %918
        %v921 = vsel %vm477, 0.0, %v919
        %v922 = vadd.f32 %v916, %v921
        %v923 = vld [vmem:[#allocation2] sm:$0x1]
        %925 = vset.pattern.permute.xlu0 0
        %926 = vperm.xlu0 %925, %v923
        %v927 = vpop.permute.xlu0 %926
        %v929 = vlaneseq
        %v930 = vshrl.u32 %v929, 7
        %v931 = vsub.s32 0, %v930
        %v932 = vrot.slane %v927, %v931
        %v933 = vadd.f32 %v922, %v932
        %v934 = vld [vmem:[#allocation3] sm:$0x1]
        %936 = vset.pattern.permute.xlu0 0
        %937 = vperm.xlu0 %936, %v934
        %v938 = vpop.permute.xlu0 %937
        %v940 = vlaneseq
        %v941 = vshrl.u32 %v940, 7
        %v942 = vsub.s32 0, %v941
        %v943 = vrot.slane %v938, %v942
        %v944 = vadd.f32 %v922, %v943
        %946 = vrot.lane.b32.xlu0 %v933, 1
        %v947 = vpop.permute.xlu0 %946
        %vm949 = vcmask 0
        %950 = vst.msk [vmem:[#allocation2] sm:$0x1] %vm949, %v947
        %952 = vrot.lane.b32.xlu0 %v944, 1
        %v953 = vpop.permute.xlu0 %952
        %vm955 = vcmask 1025
        %956 = vst.msk [vmem:[#allocation3 - $0x1] sm:$0x2] %vm955, %v953
        %v957 = vlaneseq
        %v958 = vand.u32 %v957, 127
        %v959 = vcvt.s32.f32 %v958
        %s960 = smul.u32 %s22, 128
        %s961 = scvt.s32.f32 %s960
        %v962 = vstv %s961
        %v963 = vadd.f32 %v962, %v959
        %v964 = vadd.f32 %v963, 1.0
        %v965 = vmul.f32 %v964, 128.0
        %v966 = vrcp.pop %v965
        %v967 = vmul.f32 %v933, %v966
        %v968 = vmul.f32 %v944, %v966
        %v969 = vmul.f32 %v967, %v967
        %v971 = vrot.slane %v969, 7
        %v973 = vsub.f32 %v968, %v971
        %v974 = vmax.f32 %v973, 0.0
        %v975 = vadd.f32 %v974, 1e-12
        %v976 = vrsqrt.pop %v975
        %v977 = vlaneseq
        %v978 = vshrl.u32 %v977, 7
        %v979 = vsub.s32 0, %v978
        %v980 = vrot.slane %v967, %v979
        %v981 = vsub.f32 %v800, %v980
        %v982 = vsub.f32 %v801, %v980
        %v983 = vsub.f32 %v802, %v980
        %v984 = vsub.f32 %v803, %v980
        %v985 = vsub.f32 %v804, %v980
        %v986 = vsub.f32 %v805, %v980
        %v987 = vsub.f32 %v806, %v980
        %v988 = vsub.f32 %v807, %v980
        %v989 = vsub.f32 %v808, %v980
        %v990 = vsub.f32 %v809, %v980
        %v991 = vsub.f32 %v810, %v980
        %v992 = vsub.f32 %v811, %v980
        %v993 = vsub.f32 %v812, %v980
        %v994 = vsub.f32 %v813, %v980
        %v995 = vsub.f32 %v814, %v980
        %v996 = vsub.f32 %v815, %v980
        %v997 = vlaneseq
        %v998 = vshrl.u32 %v997, 7
        %v999 = vsub.s32 1, %v998
        %v1000 = vrot.slane %v976, %v999
        %v1001 = vmul.f32 %v981, %v1000
        %v1002 = vmul.f32 %v982, %v1000
        %v1003 = vmul.f32 %v983, %v1000
        %v1004 = vmul.f32 %v984, %v1000
        %v1005 = vmul.f32 %v985, %v1000
        %v1006 = vmul.f32 %v986, %v1000
        %v1007 = vmul.f32 %v987, %v1000
        %v1008 = vmul.f32 %v988, %v1000
        %v1009 = vmul.f32 %v989, %v1000
        %v1010 = vmul.f32 %v990, %v1000
        %v1011 = vmul.f32 %v991, %v1000
        %v1012 = vmul.f32 %v992, %v1000
        %v1013 = vmul.f32 %v993, %v1000
        %v1014 = vmul.f32 %v994, %v1000
        %v1015 = vmul.f32 %v995, %v1000
        %v1016 = vmul.f32 %v996, %v1000
        %v1017 = vld [vmem:[%s2] sm:$0xff]
        %v1018 = vld [vmem:[%s2 + $0x8] sm:$0xff]
        %v1019 = vld [vmem:[%s2 + $0x10] sm:$0xff]
        %v1020 = vld [vmem:[%s2 + $0x18] sm:$0xff]
        %v1021 = vld [vmem:[%s2 + $0x20] sm:$0xff]
        %v1022 = vld [vmem:[%s2 + $0x28] sm:$0xff]
        %v1023 = vld [vmem:[%s2 + $0x30] sm:$0xff]
        %v1024 = vld [vmem:[%s2 + $0x38] sm:$0xff]
        %v1025 = vld [vmem:[%s2 + $0x40] sm:$0xff]
        %v1026 = vld [vmem:[%s2 + $0x48] sm:$0xff]
        %v1027 = vld [vmem:[%s2 + $0x50] sm:$0xff]
        %v1028 = vld [vmem:[%s2 + $0x58] sm:$0xff]
        %v1029 = vld [vmem:[%s2 + $0x60] sm:$0xff]
        %v1030 = vld [vmem:[%s2 + $0x68] sm:$0xff]
        %v1031 = vld [vmem:[%s2 + $0x70] sm:$0xff]
        %v1032 = vld [vmem:[%s2 + $0x78] sm:$0xff]
        %1034 = vset.pattern.permute.xlu0 1
        %1035 = vperm.xlu0 %1034, %v1017
        %v1036 = vpop.permute.xlu0 %1035
        %1039 = vset.pattern.permute.xlu0 1
        %1040 = vperm.xlu0 %1039, %v1018
        %v1041 = vpop.permute.xlu0 %1040
        %1044 = vset.pattern.permute.xlu0 1
        %1045 = vperm.xlu0 %1044, %v1019
        %v1046 = vpop.permute.xlu0 %1045
        %1049 = vset.pattern.permute.xlu0 1
        %1050 = vperm.xlu0 %1049, %v1020
        %v1051 = vpop.permute.xlu0 %1050
        %1054 = vset.pattern.permute.xlu0 1
        %1055 = vperm.xlu0 %1054, %v1021
        %v1056 = vpop.permute.xlu0 %1055
        %1059 = vset.pattern.permute.xlu0 1
        %1060 = vperm.xlu0 %1059, %v1022
        %v1061 = vpop.permute.xlu0 %1060
        %1064 = vset.pattern.permute.xlu0 1
        %1065 = vperm.xlu0 %1064, %v1023
        %v1066 = vpop.permute.xlu0 %1065
        %1069 = vset.pattern.permute.xlu0 1
        %1070 = vperm.xlu0 %1069, %v1024
        %v1071 = vpop.permute.xlu0 %1070
        %1074 = vset.pattern.permute.xlu0 1
        %1075 = vperm.xlu0 %1074, %v1025
        %v1076 = vpop.permute.xlu0 %1075
        %1079 = vset.pattern.permute.xlu0 1
        %1080 = vperm.xlu0 %1079, %v1026
        %v1081 = vpop.permute.xlu0 %1080
        %1084 = vset.pattern.permute.xlu0 1
        %1085 = vperm.xlu0 %1084, %v1027
        %v1086 = vpop.permute.xlu0 %1085
        %1089 = vset.pattern.permute.xlu0 1
        %1090 = vperm.xlu0 %1089, %v1028
        %v1091 = vpop.permute.xlu0 %1090
        %1094 = vset.pattern.permute.xlu0 1
        %1095 = vperm.xlu0 %1094, %v1029
        %v1096 = vpop.permute.xlu0 %1095
        %1099 = vset.pattern.permute.xlu0 1
        %1100 = vperm.xlu0 %1099, %v1030
        %v1101 = vpop.permute.xlu0 %1100
        %1104 = vset.pattern.permute.xlu0 1
        %1105 = vperm.xlu0 %1104, %v1031
        %v1106 = vpop.permute.xlu0 %1105
        %1109 = vset.pattern.permute.xlu0 1
        %1110 = vperm.xlu0 %1109, %v1032
        %v1111 = vpop.permute.xlu0 %1110
        %v1113 = vmul.f32 %v1001, %v1036
        %v1114 = vmul.f32 %v1002, %v1041
        %v1115 = vmul.f32 %v1003, %v1046
        %v1116 = vmul.f32 %v1004, %v1051
        %v1117 = vmul.f32 %v1005, %v1056
        %v1118 = vmul.f32 %v1006, %v1061
        %v1119 = vmul.f32 %v1007, %v1066
        %v1120 = vmul.f32 %v1008, %v1071
        %v1121 = vmul.f32 %v1009, %v1076
        %v1122 = vmul.f32 %v1010, %v1081
        %v1123 = vmul.f32 %v1011, %v1086
        %v1124 = vmul.f32 %v1012, %v1091
        %v1125 = vmul.f32 %v1013, %v1096
        %v1126 = vmul.f32 %v1014, %v1101
        %v1127 = vmul.f32 %v1015, %v1106
        %v1128 = vmul.f32 %v1016, %v1111
        %1129 = vset.pattern.permute.xlu0 2
        %1130 = vperm.xlu0 %1129, %v1017
        %v1131 = vpop.permute.xlu0 %1130
        %1133 = vset.pattern.permute.xlu0 2
        %1134 = vperm.xlu0 %1133, %v1018
        %v1135 = vpop.permute.xlu0 %1134
        %1137 = vset.pattern.permute.xlu0 2
        %1138 = vperm.xlu0 %1137, %v1019
        %v1139 = vpop.permute.xlu0 %1138
        %1141 = vset.pattern.permute.xlu0 2
        %1142 = vperm.xlu0 %1141, %v1020
        %v1143 = vpop.permute.xlu0 %1142
        %1145 = vset.pattern.permute.xlu0 2
        %1146 = vperm.xlu0 %1145, %v1021
        %v1147 = vpop.permute.xlu0 %1146
        %1149 = vset.pattern.permute.xlu0 2
        %1150 = vperm.xlu0 %1149, %v1022
        %v1151 = vpop.permute.xlu0 %1150
        %1153 = vset.pattern.permute.xlu0 2
        %1154 = vperm.xlu0 %1153, %v1023
        %v1155 = vpop.permute.xlu0 %1154
        %1157 = vset.pattern.permute.xlu0 2
        %1158 = vperm.xlu0 %1157, %v1024
        %v1159 = vpop.permute.xlu0 %1158
        %1161 = vset.pattern.permute.xlu0 2
        %1162 = vperm.xlu0 %1161, %v1025
        %v1163 = vpop.permute.xlu0 %1162
        %1165 = vset.pattern.permute.xlu0 2
        %1166 = vperm.xlu0 %1165, %v1026
        %v1167 = vpop.permute.xlu0 %1166
        %1169 = vset.pattern.permute.xlu0 2
        %1170 = vperm.xlu0 %1169, %v1027
        %v1171 = vpop.permute.xlu0 %1170
        %1173 = vset.pattern.permute.xlu0 2
        %1174 = vperm.xlu0 %1173, %v1028
        %v1175 = vpop.permute.xlu0 %1174
        %1177 = vset.pattern.permute.xlu0 2
        %1178 = vperm.xlu0 %1177, %v1029
        %v1179 = vpop.permute.xlu0 %1178
        %1181 = vset.pattern.permute.xlu0 2
        %1182 = vperm.xlu0 %1181, %v1030
        %v1183 = vpop.permute.xlu0 %1182
        %1185 = vset.pattern.permute.xlu0 2
        %1186 = vperm.xlu0 %1185, %v1031
        %v1187 = vpop.permute.xlu0 %1186
        %1189 = vset.pattern.permute.xlu0 2
        %1190 = vperm.xlu0 %1189, %v1032
        %v1191 = vpop.permute.xlu0 %1190
        %v1193 = vadd.f32 %v1113, %v1131
        %v1194 = vadd.f32 %v1114, %v1135
        %v1195 = vadd.f32 %v1115, %v1139
        %v1196 = vadd.f32 %v1116, %v1143
        %v1197 = vadd.f32 %v1117, %v1147
        %v1198 = vadd.f32 %v1118, %v1151
        %v1199 = vadd.f32 %v1119, %v1155
        %v1200 = vadd.f32 %v1120, %v1159
        %v1201 = vadd.f32 %v1121, %v1163
        %v1202 = vadd.f32 %v1122, %v1167
        %v1203 = vadd.f32 %v1123, %v1171
        %v1204 = vadd.f32 %v1124, %v1175
        %v1205 = vadd.f32 %v1125, %v1179
        %v1206 = vadd.f32 %v1126, %v1183
        %v1207 = vadd.f32 %v1127, %v1187
        %v1208 = vadd.f32 %v1128, %v1191
        %vm1209 = vcmp.gt.f32.partialorder %v1193, 0.0
        %vm1210 = vcmp.gt.f32.partialorder %v1194, 0.0
        %vm1211 = vcmp.gt.f32.partialorder %v1195, 0.0
        %vm1212 = vcmp.gt.f32.partialorder %v1196, 0.0
        %vm1213 = vcmp.gt.f32.partialorder %v1197, 0.0
        %vm1214 = vcmp.gt.f32.partialorder %v1198, 0.0
        %vm1215 = vcmp.gt.f32.partialorder %v1199, 0.0
        %vm1216 = vcmp.gt.f32.partialorder %v1200, 0.0
        %vm1217 = vcmp.gt.f32.partialorder %v1201, 0.0
        %vm1218 = vcmp.gt.f32.partialorder %v1202, 0.0
        %vm1219 = vcmp.gt.f32.partialorder %v1203, 0.0
        %vm1220 = vcmp.gt.f32.partialorder %v1204, 0.0
        %vm1221 = vcmp.gt.f32.partialorder %v1205, 0.0
        %vm1222 = vcmp.gt.f32.partialorder %v1206, 0.0
        %vm1223 = vcmp.gt.f32.partialorder %v1207, 0.0
        %vm1224 = vcmp.gt.f32.partialorder %v1208, 0.0
        %1225 = vset.pattern.permute.xlu0 3
        %1226 = vperm.xlu0 %1225, %v1017
        %v1227 = vpop.permute.xlu0 %1226
        %1229 = vset.pattern.permute.xlu0 3
        %1230 = vperm.xlu0 %1229, %v1018
        %v1231 = vpop.permute.xlu0 %1230
        %1233 = vset.pattern.permute.xlu0 3
        %1234 = vperm.xlu0 %1233, %v1019
        %v1235 = vpop.permute.xlu0 %1234
        %1237 = vset.pattern.permute.xlu0 3
        %1238 = vperm.xlu0 %1237, %v1020
        %v1239 = vpop.permute.xlu0 %1238
        %1241 = vset.pattern.permute.xlu0 3
        %1242 = vperm.xlu0 %1241, %v1021
        %v1243 = vpop.permute.xlu0 %1242
        %1245 = vset.pattern.permute.xlu0 3
        %1246 = vperm.xlu0 %1245, %v1022
        %v1247 = vpop.permute.xlu0 %1246
        %1249 = vset.pattern.permute.xlu0 3
        %1250 = vperm.xlu0 %1249, %v1023
        %v1251 = vpop.permute.xlu0 %1250
        %1253 = vset.pattern.permute.xlu0 3
        %1254 = vperm.xlu0 %1253, %v1024
        %v1255 = vpop.permute.xlu0 %1254
        %1257 = vset.pattern.permute.xlu0 3
        %1258 = vperm.xlu0 %1257, %v1025
        %v1259 = vpop.permute.xlu0 %1258
        %1261 = vset.pattern.permute.xlu0 3
        %1262 = vperm.xlu0 %1261, %v1026
        %v1263 = vpop.permute.xlu0 %1262
        %1265 = vset.pattern.permute.xlu0 3
        %1266 = vperm.xlu0 %1265, %v1027
        %v1267 = vpop.permute.xlu0 %1266
        %1269 = vset.pattern.permute.xlu0 3
        %1270 = vperm.xlu0 %1269, %v1028
        %v1271 = vpop.permute.xlu0 %1270
        %1273 = vset.pattern.permute.xlu0 3
        %1274 = vperm.xlu0 %1273, %v1029
        %v1275 = vpop.permute.xlu0 %1274
        %1277 = vset.pattern.permute.xlu0 3
        %1278 = vperm.xlu0 %1277, %v1030
        %v1279 = vpop.permute.xlu0 %1278
        %1281 = vset.pattern.permute.xlu0 3
        %1282 = vperm.xlu0 %1281, %v1031
        %v1283 = vpop.permute.xlu0 %1282
        %1285 = vset.pattern.permute.xlu0 3
        %1286 = vperm.xlu0 %1285, %v1032
        %v1287 = vpop.permute.xlu0 %1286
        %v1289 = vmul.f32 %v1227, %v1193
        %v1290 = vmul.f32 %v1231, %v1194
        %v1291 = vmul.f32 %v1235, %v1195
        %v1292 = vmul.f32 %v1239, %v1196
        %v1293 = vmul.f32 %v1243, %v1197
        %v1294 = vmul.f32 %v1247, %v1198
        %v1295 = vmul.f32 %v1251, %v1199
        %v1296 = vmul.f32 %v1255, %v1200
        %v1297 = vmul.f32 %v1259, %v1201
        %v1298 = vmul.f32 %v1263, %v1202
        %v1299 = vmul.f32 %v1267, %v1203
        %v1300 = vmul.f32 %v1271, %v1204
        %v1301 = vmul.f32 %v1275, %v1205
        %v1302 = vmul.f32 %v1279, %v1206
        %v1303 = vmul.f32 %v1283, %v1207
        %v1304 = vmul.f32 %v1287, %v1208
        %v1305 = vsel %vm1209, %v1193, %v1289
        %v1306 = vsel %vm1210, %v1194, %v1290
        %v1307 = vsel %vm1211, %v1195, %v1291
        %v1308 = vsel %vm1212, %v1196, %v1292
        %v1309 = vsel %vm1213, %v1197, %v1293
        %v1310 = vsel %vm1214, %v1198, %v1294
        %v1311 = vsel %vm1215, %v1199, %v1295
        %v1312 = vsel %vm1216, %v1200, %v1296
        %v1313 = vsel %vm1217, %v1201, %v1297
        %v1314 = vsel %vm1218, %v1202, %v1298
        %v1315 = vsel %vm1219, %v1203, %v1299
        %v1316 = vsel %vm1220, %v1204, %v1300
        %v1317 = vsel %vm1221, %v1205, %v1301
        %v1318 = vsel %vm1222, %v1206, %v1302
        %v1319 = vsel %vm1223, %v1207, %v1303
        %v1320 = vsel %vm1224, %v1208, %v1304
        %1321 = vst [vmem:[%s187] sm:$0xff] %v1305
        %1322 = vst [vmem:[%s187 + $0x8] sm:$0xff] %v1306
        %1323 = vst [vmem:[%s187 + $0x10] sm:$0xff] %v1307
        %1324 = vst [vmem:[%s187 + $0x18] sm:$0xff] %v1308
        %1325 = vst [vmem:[%s187 + $0x20] sm:$0xff] %v1309
        %1326 = vst [vmem:[%s187 + $0x28] sm:$0xff] %v1310
        %1327 = vst [vmem:[%s187 + $0x30] sm:$0xff] %v1311
        %1328 = vst [vmem:[%s187 + $0x38] sm:$0xff] %v1312
        %1329 = vst [vmem:[%s187 + $0x40] sm:$0xff] %v1313
        %1330 = vst [vmem:[%s187 + $0x48] sm:$0xff] %v1314
        %1331 = vst [vmem:[%s187 + $0x50] sm:$0xff] %v1315
        %1332 = vst [vmem:[%s187 + $0x58] sm:$0xff] %v1316
        %1333 = vst [vmem:[%s187 + $0x60] sm:$0xff] %v1317
        %1334 = vst [vmem:[%s187 + $0x68] sm:$0xff] %v1318
        %1335 = vst [vmem:[%s187 + $0x70] sm:$0xff] %v1319
        %1336 = vst [vmem:[%s187 + $0x78] sm:$0xff] %v1320
        %s1337 = sand.u32 %s109, 1
        %s1338 = scalar_lea.sflag [#allocation5], %s1337
        %s1339 = sand.u32 %s109, 1
        %s1340 = smul.addr %s1339, 128
        %s1341 = scalar_lea.vmem [#allocation4], %s1340
        // Predicated region
        $region37: #{_forward_impl.1} parent=31 // pred_check
          %p1342 = pneg %p119
        $region38: #{_forward_impl.1} parent=31 // pred_check_branch
          %1344 = sbr.rel (%p1342) target = $region40
        $region39: #{_forward_impl.1} parent=31 // pred_region
          %s1346 = ssub.s32 2048, 2048
          %1347 = vsyncadd %s1338, %s1346
          %s1348 = smul.addr %s21, 16
          %s1349 = sadd.s32 %s22, %s1348
          %s1350 = smul.addr %s1349, 128
          %s1351 = scalar_lea.hbm %s3, %s1350
          %s1352 = sshll.u32 %s1341, 4
          %s1353 = int_to_ptr.vmem [resolvable:$true] %s1352
          %1358 = dma.vmem_to_hbm [thread:$0]  %s1353, 2048, %s1351, %s1338, 128, 128, 8
        $region40: #{_forward_impl.1} parent=31 // pred_fallthru
          _
      $region32: #{_forward_impl.1} parent=5 // pred_fallthru
        _
      %p1359 = scmp.le.s32.totalorder 2, %s12
      // Predicated region
      $region41: #{_forward_impl.1} parent=5 // pred_check
        %p1360 = pneg %p1359
      $region42: #{_forward_impl.1} parent=5 // pred_check_branch
        %1362 = sbr.rel (%p1360) target = $region44
      $region43: #{_forward_impl.1} parent=5 // pred_region
        %s1363 = ssub.s32 %s12, 2
        // Predicated region
        $region45: #{_forward_impl.1} parent=43 // pred_check
          %p1364 = pneg %p125
        $region46: #{_forward_impl.1} parent=43 // pred_check_branch
          %1366 = sbr.rel (%p1364) target = $region48
        $region47: #{_forward_impl.1} parent=43 // pred_region
          %s1367 = sand.u32 %s110, 1
          %s1368 = scalar_lea.sflag [#allocation5], %s1367
          %s1369 = sand.u32 %s110, 1
          %s1370 = smul.addr %s1369, 128
          %s1371 = scalar_lea.vmem [#allocation4], %s1370
          %1372 = dma.done %s1368, 2048
        $region48: #{_forward_impl.1} parent=43 // pred_fallthru
          _
      $region44: #{_forward_impl.1} parent=5 // pred_fallthru
        _
    $region6: #{_forward_impl.1} parent=1 // loop_footer
      %s16 = sadd.s32 1, %s12
    $region7: #{_forward_impl.1} parent=1 // loop_footer_branch
      %11 = sbr.rel target = $region3
    $region8: #{_forward_impl.1} parent=1 // loop_exit
      _
    %1373 = vsyncpa [#allocation5], 1
    %s1374 = scalar_lea.sflag [#allocation5], 1
    %1375 = vsyncpa %s1374, 1

</llo_original>
